<compile_context>
chip_gen: v5e
topology: v5e:2x2
jax: 0.10.0
libtpu: 0.0.40
codegen_flags: <defaults>
</compile_context>

<pallas_src>
import functools
import math

import jax
import jax.numpy as jnp
from jax import lax
from jax.experimental import pallas as pl
from jax.experimental.pallas import tpu as pltpu

EPS = 1e-5


# ---------------------------------------------------------------------------
# Kernel
# ---------------------------------------------------------------------------
def _basic_block_kernel(cond_ref,      # SMEM scalar prefetch, shape (1,) int32
                        x_ref,         # (Nb*H, W*C)    lane-dense input rows (f32)
                        a1_ref,        # (3*W*C, W*C)   conv1 fused-tap matrix
                        a2_ref,        # (3*W*C, W*C)   conv2 fused-tap matrix
                        bn_ref,        # (1, 4, W*C)    label-selected s1,b1,s2,b2 (f32)
                        out_ref,       # (Nb*H, W*C)
                        *, img_h, compute_dtype):
    del cond_ref                       # label selection happened via bn_ref's index_map
    m, wc = x_ref.shape
    nb = m // img_h                    # images in this block (static)

    x = x_ref[...]                     # (M, WC) f32 — kept f32 for residual / BN math

    bn = bn_ref[0]                     # (4, WC) f32
    s1, b1, s2, b2 = bn[0:1], bn[1:2], bn[2:3], bn[3:4]

    # Row-within-image index (3-D sublane iota reshaped; avoids vector int rem).
    rin = lax.broadcasted_iota(jnp.int32, (nb, img_h, wc), 1).reshape(m, wc)
    not_first = rin != 0               # rows allowed to read image row i-1
    not_last = rin != img_h - 1        # rows allowed to read image row i+1

    def conv3x3(h, a_ref):
        # H-direction halo on the XLU (sublane roll) + image-boundary mask,
        # then ONE (M, 3*WC) @ (3*WC, WC) MXU matmul applies all nine taps
        # (W-direction zero padding is encoded by missing bands in a_ref).
        up = jnp.where(not_first, pltpu.roll(h, 1, axis=0), 0.0)        # h[i-1]
        dn = jnp.where(not_last, pltpu.roll(h, m - 1, axis=0), 0.0)     # h[i+1]
        xcat = jnp.concatenate([up, h, dn], axis=-1).astype(compute_dtype)
        return jnp.dot(xcat, a_ref[...], preferred_element_type=jnp.float32)

    h1 = jnp.maximum(conv3x3(x, a1_ref) * s1 + b1, 0.0)     # conv1 + bn1 + relu (f32)
    y = conv3x3(h1, a2_ref) * s2 + b2                        # conv2 + bn2        (f32)
    out_ref[...] = jnp.maximum(y + x, 0.0)                   # residual + relu, lane-dense store


# ---------------------------------------------------------------------------
# Hoisted per-weight-update operand packing (do NOT rebuild every forward call)
# ---------------------------------------------------------------------------
def _conv_cat_matrix(w_oihw, W, dtype):
    """OIHW 3x3 conv weights -> (3*W*Cin, W*Cout) fused-tap matmul operand.

    Row block dh multiplies the halo copy holding image row i+dh-1; within a
    block, A[(j+dw-1)*Cin + ci, j*Cout + co] = w[co, ci, dh, dw]; out-of-range
    W taps are simply absent (== zero padding along W).
    """
    Cout, Cin, kh, kw = w_oihw.shape
    assert kh == 3 and kw == 3
    w_t = jnp.transpose(w_oihw, (2, 3, 1, 0)).astype(jnp.float32)   # (dh, dw, Cin, Cout)
    eye = jnp.eye(W, dtype=jnp.float32)
    mats = []
    for dh in range(3):
        a = jnp.zeros((W * Cin, W * Cout), jnp.float32)
        for dw in range(3):
            band = jnp.kron(eye, w_t[dh, dw])                        # block diagonal
            band = jnp.pad(band, ((Cin, Cin), (0, 0)))
            start = (2 - dw) * Cin                                   # shift by ow = dw - 1 blocks
            a = a + band[start:start + W * Cin, :]
        mats.append(a)
    return jnp.concatenate(mats, axis=0).astype(dtype)               # (3*W*Cin, W*Cout)


def prepare_basic_block(params, W, compute_dtype=jnp.bfloat16):
    """Precompute matmul / BN operands once per weight update."""
    a1 = _conv_cat_matrix(params["w1"], W, compute_dtype)
    a2 = _conv_cat_matrix(params["w2"], W, compute_dtype)

    def fold(g, b, m, v):                                            # inference-mode BN fold
        s = g / jnp.sqrt(v + EPS)
        return s, b - m * s

    s1, b1 = fold(params["bn1_gamma"], params["bn1_beta"],
                  params["bn1_mean"], params["bn1_var"])
    s2, b2 = fold(params["bn2_gamma"], params["bn2_beta"],
                  params["bn2_mean"], params["bn2_var"])
    bn = jnp.stack([jnp.tile(t.astype(jnp.float32), (1, W))
                    for t in (s1, b1, s2, b2)], axis=1)              # (ncond, 4, W*C)
    return {"a1": a1, "a2": a2, "bn": bn}


# ---------------------------------------------------------------------------
# Layout helpers (keep activations lane-dense between consecutive blocks)
# ---------------------------------------------------------------------------
def nchw_to_lane_dense(x_nchw):
    n, c, h, w = x_nchw.shape
    return jnp.transpose(x_nchw, (0, 2, 3, 1)).reshape(n * h, w * c).astype(jnp.float32)


def lane_dense_to_nchw(x_flat, n, c, h, w):
    return jnp.transpose(x_flat.reshape(n, h, w, c), (0, 3, 1, 2))


# ---------------------------------------------------------------------------
# Forward
# ---------------------------------------------------------------------------
def basic_block_forward(x_flat, prepared, condition_label, *, img_h, target_rows=256):
    """Pallas BasicBlock.forward on lane-dense rows.

    x_flat: (N*H, W*C) f32 (NHWC rows flattened).  Returns ((N*H, W*C), label).
    """
    m_total, wc = x_flat.shape
    n_images = m_total // img_h
    compute_dtype = prepared["a1"].dtype

    # Batch whole images per grid step so the MXU M dim approaches target_rows
    # (256 for v6e/v7x; 128 already saturates v5e).
    nb = max(1, min(n_images, target_rows // img_h))
    while n_images % nb:
        nb -= 1
    block_rows = nb * img_h

    cond = jnp.asarray([condition_label], dtype=jnp.int32)
    kernel = functools.partial(_basic_block_kernel, img_h=img_h,
                               compute_dtype=compute_dtype)

    def build_call(single_buffer_weights):
        w_kwargs = ({"pipeline_mode": pl.Buffered(1)}
                    if single_buffer_weights else {})
        grid_spec = pltpu.PrefetchScalarGridSpec(
            num_scalar_prefetch=1,
            grid=(n_images // nb,),
            in_specs=[
                pl.BlockSpec((block_rows, wc), lambda n, c: (n, 0)),      # activations
                pl.BlockSpec((3 * wc, wc), lambda n, c: (0, 0), **w_kwargs),  # conv1 taps (resident)
                pl.BlockSpec((3 * wc, wc), lambda n, c: (0, 0), **w_kwargs),  # conv2 taps (resident)
                pl.BlockSpec((1, 4, wc), lambda n, c: (c[0], 0, 0)),      # label-selected BN row
            ],
            out_specs=pl.BlockSpec((block_rows, wc), lambda n, c: (n, 0)),
        )
        # TODO(synk): set vmem_limit_bytes in CompilerParams when scaling W*C / block_rows.
        return pl.pallas_call(
            kernel,
            out_shape=jax.ShapeDtypeStruct((m_total, wc), jnp.float32),
            grid_spec=grid_spec,
            compiler_params=pltpu.CompilerParams(
                dimension_semantics=("parallel",)),      # batch axis -> both TCs when grid > 1
        )

    args = (cond, x_flat, prepared["a1"], prepared["a2"], prepared["bn"])
    try:
        out_flat = build_call(True)(*args)      # weights single-buffered (constant index_map)
    except Exception:
        # Fallback if this JAX build rejects pipeline_mode=pl.Buffered(1).
        out_flat = build_call(False)(*args)
    return out_flat, condition_label


# ---------------------------------------------------------------------------
# Pure-JAX reference of the PyTorch forward (inference-mode BN)
# ---------------------------------------------------------------------------
def _reference(x, params, cond):
    def conv(a, w):
        return lax.conv_general_dilated(a, w, (1, 1), ((1, 1), (1, 1)),
                                        dimension_numbers=("NCHW", "OIHW", "NCHW"))

    def bn(a, g, b, m, v):
        g, b, m, v = (t[:, None, None] for t in (g, b, m, v))
        return (a - m) / jnp.sqrt(v + EPS) * g + b

    out = conv(x, params["w1"])
    out = bn(out, params["bn1_gamma"][cond], params["bn1_beta"][cond],
             params["bn1_mean"][cond], params["bn1_var"][cond])
    out = jnp.maximum(out, 0.0)
    out = conv(out, params["w2"])
    out = bn(out, params["bn2_gamma"][cond], params["bn2_beta"][cond],
             params["bn2_mean"][cond], params["bn2_var"][cond])
    out = out + x
    return jnp.maximum(out, 0.0)


def init_params(key, inplanes, planes, num_conditions=2):
    k1, k2, k3, k4 = jax.random.split(key, 4)
    std1 = math.sqrt(2.0 / (inplanes * 9))
    std2 = math.sqrt(2.0 / (planes * 9))
    cond_ids = jnp.arange(num_conditions, dtype=jnp.float32)[:, None]
    return {
        "w1": jax.random.normal(k1, (planes, inplanes, 3, 3), jnp.float32) * std1,
        "w2": jax.random.normal(k2, (planes, planes, 3, 3), jnp.float32) * std2,
        "bn1_gamma": jnp.ones((num_conditions, planes), jnp.float32) + 0.1 * cond_ids,
        "bn1_beta": 0.05 * cond_ids * jnp.ones((num_conditions, planes), jnp.float32),
        "bn1_mean": jax.random.normal(k3, (num_conditions, planes), jnp.float32) * 0.1,
        "bn1_var": jnp.abs(jax.random.normal(k4, (num_conditions, planes), jnp.float32)) * 0.3 + 0.5,
        "bn2_gamma": jnp.ones((num_conditions, planes), jnp.float32) - 0.05 * cond_ids,
        "bn2_beta": -0.03 * cond_ids * jnp.ones((num_conditions, planes), jnp.float32),
        "bn2_mean": jax.random.normal(k4, (num_conditions, planes), jnp.float32) * 0.05,
        "bn2_var": jnp.abs(jax.random.normal(k3, (num_conditions, planes), jnp.float32)) * 0.2 + 0.8,
    }


if __name__ == "__main__":
    N, C, H, W = 2, 8, 16, 16          # inplanes == planes, stride=1, downsample=None; W*C = 128
    num_conditions = 2
    condition_label = 1

    key = jax.random.PRNGKey(0)
    kx, kp = jax.random.split(key)
    x = jax.random.normal(kx, (N, C, H, W), jnp.float32)
    params = init_params(kp, C, C, num_conditions)

    # Layout conversion + operand packing hoisted out of the per-call forward.
    x_flat = nchw_to_lane_dense(x)
    ref = _reference(x, params, condition_label)

    # Fast path: bf16 MXU operands (accumulation / BN / residual stay f32).
    prep_bf16 = prepare_basic_block(params, W, compute_dtype=jnp.bfloat16)
    out_flat, cond_out = basic_block_forward(x_flat, prep_bf16, condition_label, img_h=H)
    out = jax.block_until_ready(lane_dense_to_nchw(out_flat, N, C, H, W))
    assert out.shape == (N, C, H, W)
    assert cond_out == condition_label
    err_bf16 = float(jnp.max(jnp.abs(out - ref)))
    # Tolerance reflects bf16 operand quantization (~2^-9 relative) through two convs.
    assert jnp.allclose(out, ref, rtol=2e-2, atol=3e-2), err_bf16

    # Accuracy check: same kernel with f32 operands must match tightly.
    prep_f32 = prepare_basic_block(params, W, compute_dtype=jnp.float32)
    out32_flat, _ = basic_block_forward(x_flat, prep_f32, condition_label, img_h=H)
    out32 = jax.block_until_ready(lane_dense_to_nchw(out32_flat, N, C, H, W))
    err_f32 = float(jnp.max(jnp.abs(out32 - ref)))
    assert jnp.allclose(out32, ref, rtol=2e-3, atol=2e-3), err_f32

    print("KERNEL_OK")
</pallas_src>

<mosaic_0001>
module attributes {stable_mosaic.version = 11 : i64} {
  func.func @_basic_block_kernel(%arg0: i32, %arg1: memref<1xi32, #tpu.memory_space<smem>>, %arg2: memref<32x128xf32, #tpu.memory_space<vmem>>, %arg3: memref<384x128xbf16, #tpu.memory_space<vmem>>, %arg4: memref<384x128xbf16, #tpu.memory_space<vmem>>, %arg5: memref<1x4x128xf32, #tpu.memory_space<vmem>>, %arg6: memref<32x128xf32, #tpu.memory_space<vmem>>) attributes {dimension_semantics = [#tpu.dimension_semantics<parallel>], iteration_bounds = array<i64: 1>, scalar_prefetch = 1 : i64, scratch_operands = 0 : i64, tpu.core_type = #tpu.core_type<tc>, window_params = [{transform_indices = @transform_0, window_bounds = array<i64: 32, 128>}, {pipeline_mode = #tpu.pipeline_mode<synchronous>, transform_indices = @transform_1, window_bounds = array<i64: 384, 128>}, {pipeline_mode = #tpu.pipeline_mode<synchronous>, transform_indices = @transform_2, window_bounds = array<i64: 384, 128>}, {transform_indices = @transform_3, window_bounds = array<i64: 1, 4, 128>}, {transform_indices = @transform_4, window_bounds = array<i64: 32, 128>}]} {
    %c0 = arith.constant 0 : index
    %c0_0 = arith.constant 0 : index
    %0 = vector.load %arg2[%c0, %c0_0] : memref<32x128xf32, #tpu.memory_space<vmem>>, vector<32x128xf32>
    %c0_1 = arith.constant 0 : index
    %c0_2 = arith.constant 0 : index
    %c0_3 = arith.constant 0 : index
    %1 = vector.load %arg5[%c0_1, %c0_2, %c0_3] : memref<1x4x128xf32, #tpu.memory_space<vmem>>, vector<1x4x128xf32>
    %2 = vector.shape_cast %1 : vector<1x4x128xf32> to vector<4x128xf32>
    %3 = vector.extract_strided_slice %2 {offsets = [0, 0], sizes = [1, 128], strides = [1, 1]} : vector<4x128xf32> to vector<1x128xf32>
    %4 = vector.extract_strided_slice %2 {offsets = [1, 0], sizes = [1, 128], strides = [1, 1]} : vector<4x128xf32> to vector<1x128xf32>
    %5 = vector.extract_strided_slice %2 {offsets = [2, 0], sizes = [1, 128], strides = [1, 1]} : vector<4x128xf32> to vector<1x128xf32>
    %6 = vector.extract_strided_slice %2 {offsets = [3, 0], sizes = [1, 128], strides = [1, 1]} : vector<4x128xf32> to vector<1x128xf32>
    %7 = tpu.iota {dimensions = array<i32: 1>} : vector<2x16x128xi32>
    %8 = vector.shape_cast %7 : vector<2x16x128xi32> to vector<32x128xi32>
    %c0_i32 = arith.constant 0 : i32
    %9 = vector.broadcast %c0_i32 : i32 to vector<32x128xi32>
    %10 = arith.cmpi ne, %8, %9 : vector<32x128xi32>
    %c15_i32 = arith.constant 15 : i32
    %11 = vector.broadcast %c15_i32 : i32 to vector<32x128xi32>
    %12 = arith.cmpi ne, %8, %11 : vector<32x128xi32>
    %c1_i32 = arith.constant 1 : i32
    %13 = tpu.dynamic_rotate %0 by %c1_i32 dim 0 : vector<32x128xf32>, i32 -> vector<32x128xf32>
    %cst = arith.constant 0.000000e+00 : f32
    %14 = vector.broadcast %cst : f32 to vector<32x128xf32>
    %15 = arith.select %10, %13, %14 : vector<32x128xi1>, vector<32x128xf32>
    %c31_i32 = arith.constant 31 : i32
    %16 = tpu.dynamic_rotate %0 by %c31_i32 dim 0 : vector<32x128xf32>, i32 -> vector<32x128xf32>
    %cst_4 = arith.constant 0.000000e+00 : f32
    %17 = vector.broadcast %cst_4 : f32 to vector<32x128xf32>
    %18 = arith.select %12, %16, %17 : vector<32x128xi1>, vector<32x128xf32>
    %19 = tpu.concatenate %15, %0, %18 in 1 : vector<32x128xf32>, vector<32x128xf32>, vector<32x128xf32> -> vector<32x384xf32>
    %20 = arith.truncf %19 : vector<32x384xf32> to vector<32x384xbf16>
    %c0_5 = arith.constant 0 : index
    %c0_6 = arith.constant 0 : index
    %21 = vector.load %arg3[%c0_5, %c0_6] : memref<384x128xbf16, #tpu.memory_space<vmem>>, vector<384x128xbf16>
    %cst_7 = arith.constant dense<0.000000e+00> : vector<32x128xf32>
    %22 = tpu.matmul %20, %21, %cst_7 {dimension_numbers = #tpu.dot_dimension_numbers<[1], [0], [0], [1], [0, 0, 1, 1], [], []>} : vector<32x384xbf16>, vector<384x128xbf16>, vector<32x128xf32> -> vector<32x128xf32>
    %23 = vector.broadcast %3 : vector<1x128xf32> to vector<32x128xf32>
    %24 = arith.mulf %22, %23 : vector<32x128xf32>
    %25 = vector.broadcast %4 : vector<1x128xf32> to vector<32x128xf32>
    %26 = arith.addf %24, %25 : vector<32x128xf32>
    %cst_8 = arith.constant 0.000000e+00 : f32
    %27 = vector.broadcast %cst_8 : f32 to vector<32x128xf32>
    %28 = arith.maximumf %26, %27 : vector<32x128xf32>
    %c1_i32_9 = arith.constant 1 : i32
    %29 = tpu.dynamic_rotate %28 by %c1_i32_9 dim 0 : vector<32x128xf32>, i32 -> vector<32x128xf32>
    %cst_10 = arith.constant 0.000000e+00 : f32
    %30 = vector.broadcast %cst_10 : f32 to vector<32x128xf32>
    %31 = arith.select %10, %29, %30 : vector<32x128xi1>, vector<32x128xf32>
    %c31_i32_11 = arith.constant 31 : i32
    %32 = tpu.dynamic_rotate %28 by %c31_i32_11 dim 0 : vector<32x128xf32>, i32 -> vector<32x128xf32>
    %cst_12 = arith.constant 0.000000e+00 : f32
    %33 = vector.broadcast %cst_12 : f32 to vector<32x128xf32>
    %34 = arith.select %12, %32, %33 : vector<32x128xi1>, vector<32x128xf32>
    %35 = tpu.concatenate %31, %28, %34 in 1 : vector<32x128xf32>, vector<32x128xf32>, vector<32x128xf32> -> vector<32x384xf32>
    %36 = arith.truncf %35 : vector<32x384xf32> to vector<32x384xbf16>
    %c0_13 = arith.constant 0 : index
    %c0_14 = arith.constant 0 : index
    %37 = vector.load %arg4[%c0_13, %c0_14] : memref<384x128xbf16, #tpu.memory_space<vmem>>, vector<384x128xbf16>
    %cst_15 = arith.constant dense<0.000000e+00> : vector<32x128xf32>
    %38 = tpu.matmul %36, %37, %cst_15 {dimension_numbers = #tpu.dot_dimension_numbers<[1], [0], [0], [1], [0, 0, 1, 1], [], []>} : vector<32x384xbf16>, vector<384x128xbf16>, vector<32x128xf32> -> vector<32x128xf32>
    %39 = vector.broadcast %5 : vector<1x128xf32> to vector<32x128xf32>
    %40 = arith.mulf %38, %39 : vector<32x128xf32>
    %41 = vector.broadcast %6 : vector<1x128xf32> to vector<32x128xf32>
    %42 = arith.addf %40, %41 : vector<32x128xf32>
    %43 = arith.addf %42, %0 : vector<32x128xf32>
    %cst_16 = arith.constant 0.000000e+00 : f32
    %44 = vector.broadcast %cst_16 : f32 to vector<32x128xf32>
    %45 = arith.maximumf %43, %44 : vector<32x128xf32>
    %c0_17 = arith.constant 0 : index
    %c0_18 = arith.constant 0 : index
    %46 = vector.load %arg6[%c0_17, %c0_18] : memref<32x128xf32, #tpu.memory_space<vmem>>, vector<32x128xf32>
    tpu.vector_store %arg6[%c0_17, %c0_18], %45 {strides = array<i32>} : memref<32x128xf32, #tpu.memory_space<vmem>>, vector<32x128xf32>,
    return
  }
  func.func @transform_0(%arg0: i32, %arg1: memref<1xi32, #tpu.memory_space<smem>>) -> (i32, i32) {
    %c0_i32 = arith.constant 0 : i32
    %c0_i32_0 = arith.constant 0 : i32
    return %arg0, %c0_i32 : i32, i32
  }
  func.func @transform_1(%arg0: i32, %arg1: memref<1xi32, #tpu.memory_space<smem>>) -> (i32, i32) {
    %c0_i32 = arith.constant 0 : i32
    %c0_i32_0 = arith.constant 0 : i32
    %c0_i32_1 = arith.constant 0 : i32
    return %c0_i32, %c0_i32_0 : i32, i32
  }
  func.func @transform_2(%arg0: i32, %arg1: memref<1xi32, #tpu.memory_space<smem>>) -> (i32, i32) {
    %c0_i32 = arith.constant 0 : i32
    %c0_i32_0 = arith.constant 0 : i32
    %c0_i32_1 = arith.constant 0 : i32
    return %c0_i32, %c0_i32_0 : i32, i32
  }
  func.func @transform_3(%arg0: i32, %arg1: memref<1xi32, #tpu.memory_space<smem>>) -> (i32, i32, i32) {
    %c0 = arith.constant 0 : index
    %0 = memref.load %arg1[%c0] : memref<1xi32, #tpu.memory_space<smem>>
    %c0_i32 = arith.constant 0 : i32
    %c0_i32_0 = arith.constant 0 : i32
    %c0_i32_1 = arith.constant 0 : i32
    return %0, %c0_i32, %c0_i32_0 : i32, i32, i32
  }
  func.func @transform_4(%arg0: i32, %arg1: memref<1xi32, #tpu.memory_space<smem>>) -> (i32, i32) {
    %c0_i32 = arith.constant 0 : i32
    %c0_i32_0 = arith.constant 0 : i32
    return %arg0, %c0_i32 : i32, i32
  }
}

module attributes {stable_mosaic.version = 11 : i64} {
  func.func @_basic_block_kernel(%arg0: i32, %arg1: memref<1xi32, #tpu.memory_space<smem>>, %arg2: memref<32x128xf32, #tpu.memory_space<vmem>>, %arg3: memref<384x128xbf16, #tpu.memory_space<vmem>>, %arg4: memref<384x128xbf16, #tpu.memory_space<vmem>>, %arg5: memref<1x4x128xf32, #tpu.memory_space<vmem>>, %arg6: memref<32x128xf32, #tpu.memory_space<vmem>>) attributes {dimension_semantics = [#tpu.dimension_semantics<parallel>], iteration_bounds = array<i64: 1>, scalar_prefetch = 1 : i64, scratch_operands = 0 : i64, tpu.core_type = #tpu.core_type<tc>, window_params = [{transform_indices = @transform_0, window_bounds = array<i64: 32, 128>}, {pipeline_mode = #tpu.pipeline_mode<synchronous>, transform_indices = @transform_1, window_bounds = array<i64: 384, 128>}, {pipeline_mode = #tpu.pipeline_mode<synchronous>, transform_indices = @transform_2, window_bounds = array<i64: 384, 128>}, {transform_indices = @transform_3, window_bounds = array<i64: 1, 4, 128>}, {transform_indices = @transform_4, window_bounds = array<i64: 32, 128>}]} {
    %c0 = arith.constant 0 : index
    %c0_0 = arith.constant 0 : index
    %0 = vector.load %arg2[%c0, %c0_0] : memref<32x128xf32, #tpu.memory_space<vmem>>, vector<32x128xf32>
    %c0_1 = arith.constant 0 : index
    %c0_2 = arith.constant 0 : index
    %c0_3 = arith.constant 0 : index
    %1 = vector.load %arg5[%c0_1, %c0_2, %c0_3] : memref<1x4x128xf32, #tpu.memory_space<vmem>>, vector<1x4x128xf32>
    %2 = vector.shape_cast %1 : vector<1x4x128xf32> to vector<4x128xf32>
    %3 = vector.extract_strided_slice %2 {offsets = [0, 0], sizes = [1, 128], strides = [1, 1]} : vector<4x128xf32> to vector<1x128xf32>
    %4 = vector.extract_strided_slice %2 {offsets = [1, 0], sizes = [1, 128], strides = [1, 1]} : vector<4x128xf32> to vector<1x128xf32>
    %5 = vector.extract_strided_slice %2 {offsets = [2, 0], sizes = [1, 128], strides = [1, 1]} : vector<4x128xf32> to vector<1x128xf32>
    %6 = vector.extract_strided_slice %2 {offsets = [3, 0], sizes = [1, 128], strides = [1, 1]} : vector<4x128xf32> to vector<1x128xf32>
    %7 = tpu.iota {dimensions = array<i32: 1>} : vector<2x16x128xi32>
    %8 = vector.shape_cast %7 : vector<2x16x128xi32> to vector<32x128xi32>
    %c0_i32 = arith.constant 0 : i32
    %9 = vector.broadcast %c0_i32 : i32 to vector<32x128xi32>
    %10 = arith.cmpi ne, %8, %9 : vector<32x128xi32>
    %c15_i32 = arith.constant 15 : i32
    %11 = vector.broadcast %c15_i32 : i32 to vector<32x128xi32>
    %12 = arith.cmpi ne, %8, %11 : vector<32x128xi32>
    %c1_i32 = arith.constant 1 : i32
    %13 = tpu.dynamic_rotate %0 by %c1_i32 dim 0 : vector<32x128xf32>, i32 -> vector<32x128xf32>
    %cst = arith.constant 0.000000e+00 : f32
    %14 = vector.broadcast %cst : f32 to vector<32x128xf32>
    %15 = arith.select %10, %13, %14 : vector<32x128xi1>, vector<32x128xf32>
    %c31_i32 = arith.constant 31 : i32
    %16 = tpu.dynamic_rotate %0 by %c31_i32 dim 0 : vector<32x128xf32>, i32 -> vector<32x128xf32>
    %cst_4 = arith.constant 0.000000e+00 : f32
    %17 = vector.broadcast %cst_4 : f32 to vector<32x128xf32>
    %18 = arith.select %12, %16, %17 : vector<32x128xi1>, vector<32x128xf32>
    %19 = tpu.concatenate %15, %0, %18 in 1 : vector<32x128xf32>, vector<32x128xf32>, vector<32x128xf32> -> vector<32x384xf32>
    %20 = arith.truncf %19 : vector<32x384xf32> to vector<32x384xbf16>
    %c0_5 = arith.constant 0 : index
    %c0_6 = arith.constant 0 : index
    %21 = vector.load %arg3[%c0_5, %c0_6] : memref<384x128xbf16, #tpu.memory_space<vmem>>, vector<384x128xbf16>
    %cst_7 = arith.constant dense<0.000000e+00> : vector<32x128xf32>
    %22 = tpu.matmul %20, %21, %cst_7 {dimension_numbers = #tpu.dot_dimension_numbers<[1], [0], [0], [1], [0, 0, 1, 1], [], []>} : vector<32x384xbf16>, vector<384x128xbf16>, vector<32x128xf32> -> vector<32x128xf32>
    %23 = vector.broadcast %3 : vector<1x128xf32> to vector<32x128xf32>
    %24 = arith.mulf %22, %23 : vector<32x128xf32>
    %25 = vector.broadcast %4 : vector<1x128xf32> to vector<32x128xf32>
    %26 = arith.addf %24, %25 : vector<32x128xf32>
    %cst_8 = arith.constant 0.000000e+00 : f32
    %27 = vector.broadcast %cst_8 : f32 to vector<32x128xf32>
    %28 = arith.maximumf %26, %27 : vector<32x128xf32>
    %c1_i32_9 = arith.constant 1 : i32
    %29 = tpu.dynamic_rotate %28 by %c1_i32_9 dim 0 : vector<32x128xf32>, i32 -> vector<32x128xf32>
    %cst_10 = arith.constant 0.000000e+00 : f32
    %30 = vector.broadcast %cst_10 : f32 to vector<32x128xf32>
    %31 = arith.select %10, %29, %30 : vector<32x128xi1>, vector<32x128xf32>
    %c31_i32_11 = arith.constant 31 : i32
    %32 = tpu.dynamic_rotate %28 by %c31_i32_11 dim 0 : vector<32x128xf32>, i32 -> vector<32x128xf32>
    %cst_12 = arith.constant 0.000000e+00 : f32
    %33 = vector.broadcast %cst_12 : f32 to vector<32x128xf32>
    %34 = arith.select %12, %32, %33 : vector<32x128xi1>, vector<32x128xf32>
    %35 = tpu.concatenate %31, %28, %34 in 1 : vector<32x128xf32>, vector<32x128xf32>, vector<32x128xf32> -> vector<32x384xf32>
    %36 = arith.truncf %35 : vector<32x384xf32> to vector<32x384xbf16>
    %c0_13 = arith.constant 0 : index
    %c0_14 = arith.constant 0 : index
    %37 = vector.load %arg4[%c0_13, %c0_14] : memref<384x128xbf16, #tpu.memory_space<vmem>>, vector<384x128xbf16>
    %cst_15 = arith.constant dense<0.000000e+00> : vector<32x128xf32>
    %38 = tpu.matmul %36, %37, %cst_15 {dimension_numbers = #tpu.dot_dimension_numbers<[1], [0], [0], [1], [0, 0, 1, 1], [], []>} : vector<32x384xbf16>, vector<384x128xbf16>, vector<32x128xf32> -> vector<32x128xf32>
    %39 = vector.broadcast %5 : vector<1x128xf32> to vector<32x128xf32>
    %40 = arith.mulf %38, %39 : vector<32x128xf32>
    %41 = vector.broadcast %6 : vector<1x128xf32> to vector<32x128xf32>
    %42 = arith.addf %40, %41 : vector<32x128xf32>
    %43 = arith.addf %42, %0 : vector<32x128xf32>
    %cst_16 = arith.constant 0.000000e+00 : f32
    %44 = vector.broadcast %cst_16 : f32 to vector<32x128xf32>
    %45 = arith.maximumf %43, %44 : vector<32x128xf32>
    %c0_17 = arith.constant 0 : index
    %c0_18 = arith.constant 0 : index
    %46 = vector.load %arg6[%c0_17, %c0_18] : memref<32x128xf32, #tpu.memory_space<vmem>>, vector<32x128xf32>
    tpu.vector_store %arg6[%c0_17, %c0_18], %45 {strides = array<i32>} : memref<32x128xf32, #tpu.memory_space<vmem>>, vector<32x128xf32>,
    return
  }
  func.func @transform_0(%arg0: i32, %arg1: memref<1xi32, #tpu.memory_space<smem>>) -> (i32, i32) {
    %c0_i32 = arith.constant 0 : i32
    %c0_i32_0 = arith.constant 0 : i32
    return %arg0, %c0_i32 : i32, i32
  }
  func.func @transform_1(%arg0: i32, %arg1: memref<1xi32, #tpu.memory_space<smem>>) -> (i32, i32) {
    %c0_i32 = arith.constant 0 : i32
    %c0_i32_0 = arith.constant 0 : i32
    %c0_i32_1 = arith.constant 0 : i32
    return %c0_i32, %c0_i32_0 : i32, i32
  }
  func.func @transform_2(%arg0: i32, %arg1: memref<1xi32, #tpu.memory_space<smem>>) -> (i32, i32) {
    %c0_i32 = arith.constant 0 : i32
    %c0_i32_0 = arith.constant 0 : i32
    %c0_i32_1 = arith.constant 0 : i32
    return %c0_i32, %c0_i32_0 : i32, i32
  }
  func.func @transform_3(%arg0: i32, %arg1: memref<1xi32, #tpu.memory_space<smem>>) -> (i32, i32, i32) {
    %c0 = arith.constant 0 : index
    %0 = memref.load %arg1[%c0] : memref<1xi32, #tpu.memory_space<smem>>
    %c0_i32 = arith.constant 0 : i32
    %c0_i32_0 = arith.constant 0 : i32
    %c0_i32_1 = arith.constant 0 : i32
    return %0, %c0_i32, %c0_i32_0 : i32, i32, i32
  }
  func.func @transform_4(%arg0: i32, %arg1: memref<1xi32, #tpu.memory_space<smem>>) -> (i32, i32) {
    %c0_i32 = arith.constant 0 : i32
    %c0_i32_0 = arith.constant 0 : i32
    return %arg0, %c0_i32 : i32, i32
  }
}

</mosaic_0001>

<llo_original>
// kernel: tpu_custom_call.1
$region0: #{tpu_custom_call.1}
  #allocation0 [shape = 'u32[]', space=smem, size = 0x4, offset = 0x4, fixed_abs, tag = 'smem constant byte address 0x4 - core index']
  #allocation1 [shape = 'u32[72,128]{1,0:T(1,128)}', space=vmem, size = 0x9000, scoped, tag = 'internal scratch']
  #allocation2 [shape = 's32[1]{0}', space=sflag, size = 0x4, scoped, tag = 'scoped memory for tpu_custom_call.1']
  #allocation3 [shape = 's32[1]{0:T(128)S(6)}', space=smem, size = 0x200, scoped, tag = 'prefetched SMEM operand 0']
  %s0 = inlined_call_operand.<no memory space> [shape: s32[1], index: 0, kind: input, shape index: {}]
  %s1 = inlined_call_operand.hbm [shape: f32[32,128], index: 1, kind: input, shape index: {}]
  %s2 = inlined_call_operand.hbm [shape: bf16[384,128], index: 2, kind: input, shape index: {}]
  %s3 = inlined_call_operand.hbm [shape: bf16[384,128], index: 3, kind: input, shape index: {}]
  %s4 = inlined_call_operand.hbm [shape: f32[2,4,128], index: 4, kind: input, shape index: {}]
  %s5 = inlined_call_operand.hbm [shape: f32[32,128], index: 5, kind: output, shape index: {}]
  %s6 = sld [smem:[#allocation0]]
  $region42: #{tpu_custom_call.1} parent=0
    _
  %s8 = ssub.s32 1, %s6
  %s9 = scalar_select 0, %s8, %s6
  %10 = sst [smem:[#allocation3]] %s0
  $region1: #{tpu_custom_call.1} parent=0
    #allocation4 [shape = 'u8[16384]{0}', space=vmem, size = 0x4000, scoped, tag = 'input window, operand 1, single buffered']
    #allocation5 [shape = 's32[1]{0}', space=sflag, size = 0x4, scoped, tag = 'scoped memory for tpu_custom_call.1']
    #allocation6 [shape = 's32[1]{0}', space=sflag, size = 0x4, scoped, tag = 'scoped memory for tpu_custom_call.1']
    #allocation7 [shape = 'u8[98304]{0}', space=vmem, size = 0x18000, scoped, tag = 'input window, operand 2, single buffered']
    #allocation8 [shape = 's32[1]{0}', space=sflag, size = 0x4, scoped, tag = 'scoped memory for tpu_custom_call.1']
    #allocation9 [shape = 'u8[98304]{0}', space=vmem, size = 0x18000, scoped, tag = 'input window, operand 3, single buffered']
    #allocation10 [shape = 'u8[2048]{0}', space=vmem, size = 0x800, scoped, tag = 'input window, operand 4, single buffered']
    #allocation11 [shape = 's32[1]{0}', space=sflag, size = 0x4, scoped, tag = 'scoped memory for tpu_custom_call.1']
    #allocation12 [shape = 'u8[16384]{0}', space=vmem, size = 0x4000, scoped, tag = 'output window, operand 0, single buffered']
    %11 = vsyncpa [#allocation5], 0
    %12 = vsyncpa [#allocation8], 0
    %13 = vsyncpa [#allocation11], 0
    %14 = vsyncpa [#allocation6], 0
    // Predicated region
    $region2: #{tpu_custom_call.1} parent=1 // pred_check
      _
    $region3: #{tpu_custom_call.1} parent=1 // pred_check_branch
      %16 = sbr.rel (0) target = $region5
    $region4: #{tpu_custom_call.1} parent=1 // pred_region
      %18 = vsyncadd [#allocation5], 0
      %s19 = sshll.u32 %s1, 4
      %s20 = int_to_ptr.hbm [resolvable:$true] %s19
      %s21 = sshll.u32 [#allocation4], 4
      %s22 = int_to_ptr.vmem [resolvable:$true] %s21
      %27 = dma.hbm_to_vmem [thread:$0]  %s20, 512, %s22, [#allocation5], 128, 128, 8
    $region5: #{tpu_custom_call.1} parent=1 // pred_fallthru
      _
    // Predicated region
    $region6: #{tpu_custom_call.1} parent=1 // pred_check
      _
    $region7: #{tpu_custom_call.1} parent=1 // pred_check_branch
      %29 = sbr.rel (0) target = $region9
    $region8: #{tpu_custom_call.1} parent=1 // pred_region
      %31 = vsyncadd [#allocation8], 0
      %s32 = sshll.u32 %s2, 4
      %s33 = int_to_ptr.hbm [resolvable:$true] %s32
      %s34 = sshll.u32 [#allocation7], 4
      %s35 = int_to_ptr.vmem [resolvable:$true] %s34
      %40 = dma.hbm_to_vmem [thread:$0]  %s33, 3072, %s35, [#allocation8], 64, 64, 4
    $region9: #{tpu_custom_call.1} parent=1 // pred_fallthru
      _
    // Predicated region
    $region10: #{tpu_custom_call.1} parent=1 // pred_check
      _
    $region11: #{tpu_custom_call.1} parent=1 // pred_check_branch
      %42 = sbr.rel (0) target = $region13
    $region12: #{tpu_custom_call.1} parent=1 // pred_region
      %44 = vsyncadd [#allocation8], 0
      %s45 = sshll.u32 %s3, 4
      %s46 = int_to_ptr.hbm [resolvable:$true] %s45
      %s47 = sshll.u32 [#allocation9], 4
      %s48 = int_to_ptr.vmem [resolvable:$true] %s47
      %53 = dma.hbm_to_vmem [thread:$0]  %s46, 3072, %s48, [#allocation8], 64, 64, 4
    $region13: #{tpu_custom_call.1} parent=1 // pred_fallthru
      _
    // Predicated region
    $region14: #{tpu_custom_call.1} parent=1 // pred_check
      _
    $region15: #{tpu_custom_call.1} parent=1 // pred_check_branch
      %55 = sbr.rel (0) target = $region17
    $region16: #{tpu_custom_call.1} parent=1 // pred_region
      %s56 = sld [smem:[#allocation3]]
      %58 = vsyncadd [#allocation11], 0
      %s59 = smul.addr %s56, 4
      %s60 = scalar_lea.hbm %s4, %s59
      %s62 = sshll.u32 %s60, 4
      %s63 = int_to_ptr.hbm [resolvable:$true] %s62
      %s64 = sshll.u32 [#allocation10], 4
      %s65 = int_to_ptr.vmem [resolvable:$true] %s64
      %67 = dma.hbm_to_vmem [thread:$0]  %s63, 64, %s65, [#allocation11]
    $region17: #{tpu_custom_call.1} parent=1 // pred_fallthru
      _
    // Predicated region
    $region18: #{tpu_custom_call.1} parent=1 // pred_check
      _
    $region19: #{tpu_custom_call.1} parent=1 // pred_check_branch
      %69 = sbr.rel (0) target = $region21
    $region20: #{tpu_custom_call.1} parent=1 // pred_region
      %71 = dma.done [#allocation5], 512
    $region21: #{tpu_custom_call.1} parent=1 // pred_fallthru
      _
    // Predicated region
    $region22: #{tpu_custom_call.1} parent=1 // pred_check
      _
    $region23: #{tpu_custom_call.1} parent=1 // pred_check_branch
      %73 = sbr.rel (0) target = $region25
    $region24: #{tpu_custom_call.1} parent=1 // pred_region
      %75 = dma.done [#allocation8], 3072
    $region25: #{tpu_custom_call.1} parent=1 // pred_fallthru
      _
    // Predicated region
    $region26: #{tpu_custom_call.1} parent=1 // pred_check
      _
    $region27: #{tpu_custom_call.1} parent=1 // pred_check_branch
      %77 = sbr.rel (0) target = $region29
    $region28: #{tpu_custom_call.1} parent=1 // pred_region
      %79 = dma.done [#allocation8], 3072
    $region29: #{tpu_custom_call.1} parent=1 // pred_fallthru
      _
    // Predicated region
    $region30: #{tpu_custom_call.1} parent=1 // pred_check
      _
    $region31: #{tpu_custom_call.1} parent=1 // pred_check_branch
      %81 = sbr.rel (0) target = $region33
    $region32: #{tpu_custom_call.1} parent=1 // pred_region
      %83 = dma.done [#allocation11], 64
    $region33: #{tpu_custom_call.1} parent=1 // pred_fallthru
      _
    %s84 = sld [smem:[#allocation3]]
    %v85 = vld [vmem:[#allocation4] sm:$0xff]
    %v86 = vld [vmem:[#allocation4 + $0x8] sm:$0xff]
    %v87 = vld [vmem:[#allocation4 + $0x10] sm:$0xff]
    %v88 = vld [vmem:[#allocation4 + $0x18] sm:$0xff]
    %v89 = vld [vmem:[#allocation10] sm:$0xf]
    %v90 = vlaneseq
    %v91 = vshrl.u32 %v90, 7
    %v92 = vadd.s32 %v91, 8
    %vm93 = vcmp.ne.s32.totalorder %v91, 0
    %vm94 = vcmp.ne.s32.totalorder %v92, 0
    %vm95 = vcmp.ne.s32.totalorder %v91, 15
    %vm96 = vcmp.ne.s32.totalorder %v92, 15
    %v97 = vrot.slane %v85, 7
    %v98 = vrot.slane %v86, 7
    %v99 = vrot.slane %v87, 7
    %v100 = vrot.slane %v88, 7
    %vm101 = vcmp.lt.s32.totalorder %v91, 1
    %v102 = vsel %vm101, %v99, %v100
    %v103 = vsel %vm101, %v98, %v99
    %v104 = vsel %vm101, %v97, %v98
    %v105 = vsel %vm101, %v100, %v97
    %v106 = vsel %vm93, %v105, 0.0
    %v107 = vsel %vm94, %v104, 0.0
    %v108 = vsel %vm93, %v103, 0.0
    %v109 = vsel %vm94, %v102, 0.0
    %v110 = vrot.slane %v85, 1
    %v111 = vrot.slane %v86, 1
    %v112 = vrot.slane %v87, 1
    %v113 = vrot.slane %v88, 1
    %vm114 = vcmp.lt.s32.totalorder %v91, 7
    %v115 = vsel %vm114, %v112, %v113
    %v116 = vsel %vm114, %v111, %v112
    %v117 = vsel %vm114, %v110, %v111
    %v118 = vsel %vm114, %v113, %v110
    %v119 = vsel %vm95, %v117, 0.0
    %v120 = vsel %vm96, %v116, 0.0
    %v121 = vsel %vm95, %v115, 0.0
    %v122 = vsel %vm96, %v118, 0.0
    %v123 = vpack.c.bf16 %v107, %v106
    %v124 = vpack.c.bf16 %v86, %v85
    %v125 = vpack.c.bf16 %v120, %v119
    %v126 = vpack.c.bf16 %v109, %v108
    %v127 = vpack.c.bf16 %v88, %v87
    %v128 = vpack.c.bf16 %v122, %v121
    %v129 = vld [vmem:[#allocation7] sm:$0xf]
    %v130 = vld [vmem:[#allocation7 + $0x4] sm:$0xf]
    %v131 = vld [vmem:[#allocation7 + $0x8] sm:$0xf]
    %v132 = vld [vmem:[#allocation7 + $0xc] sm:$0xf]
    %v133 = vld [vmem:[#allocation7 + $0x10] sm:$0xf]
    %v134 = vld [vmem:[#allocation7 + $0x14] sm:$0xf]
    %v135 = vld [vmem:[#allocation7 + $0x18] sm:$0xf]
    %v136 = vld [vmem:[#allocation7 + $0x1c] sm:$0xf]
    %v137 = vld [vmem:[#allocation7 + $0x20] sm:$0xf]
    %v138 = vld [vmem:[#allocation7 + $0x24] sm:$0xf]
    %v139 = vld [vmem:[#allocation7 + $0x28] sm:$0xf]
    %v140 = vld [vmem:[#allocation7 + $0x2c] sm:$0xf]
    %v141 = vld [vmem:[#allocation7 + $0x30] sm:$0xf]
    %v142 = vld [vmem:[#allocation7 + $0x34] sm:$0xf]
    %v143 = vld [vmem:[#allocation7 + $0x38] sm:$0xf]
    %v144 = vld [vmem:[#allocation7 + $0x3c] sm:$0xf]
    %v145 = vld [vmem:[#allocation7 + $0x40] sm:$0xf]
    %v146 = vld [vmem:[#allocation7 + $0x44] sm:$0xf]
    %v147 = vld [vmem:[#allocation7 + $0x48] sm:$0xf]
    %v148 = vld [vmem:[#allocation7 + $0x4c] sm:$0xf]
    %v149 = vld [vmem:[#allocation7 + $0x50] sm:$0xf]
    %v150 = vld [vmem:[#allocation7 + $0x54] sm:$0xf]
    %v151 = vld [vmem:[#allocation7 + $0x58] sm:$0xf]
    %v152 = vld [vmem:[#allocation7 + $0x5c] sm:$0xf]
    %v153 = vld [vmem:[#allocation7 + $0x60] sm:$0xf]
    %v154 = vld [vmem:[#allocation7 + $0x64] sm:$0xf]
    %v155 = vld [vmem:[#allocation7 + $0x68] sm:$0xf]
    %v156 = vld [vmem:[#allocation7 + $0x6c] sm:$0xf]
    %v157 = vld [vmem:[#allocation7 + $0x70] sm:$0xf]
    %v158 = vld [vmem:[#allocation7 + $0x74] sm:$0xf]
    %v159 = vld [vmem:[#allocation7 + $0x78] sm:$0xf]
    %v160 = vld [vmem:[#allocation7 + $0x7c] sm:$0xf]
    %v161 = vld [vmem:[#allocation7 + $0x80] sm:$0xf]
    %v162 = vld [vmem:[#allocation7 + $0x84] sm:$0xf]
    %v163 = vld [vmem:[#allocation7 + $0x88] sm:$0xf]
    %v164 = vld [vmem:[#allocation7 + $0x8c] sm:$0xf]
    %v165 = vld [vmem:[#allocation7 + $0x90] sm:$0xf]
    %v166 = vld [vmem:[#allocation7 + $0x94] sm:$0xf]
    %v167 = vld [vmem:[#allocation7 + $0x98] sm:$0xf]
    %v168 = vld [vmem:[#allocation7 + $0x9c] sm:$0xf]
    %v169 = vld [vmem:[#allocation7 + $0xa0] sm:$0xf]
    %v170 = vld [vmem:[#allocation7 + $0xa4] sm:$0xf]
    %v171 = vld [vmem:[#allocation7 + $0xa8] sm:$0xf]
    %v172 = vld [vmem:[#allocation7 + $0xac] sm:$0xf]
    %v173 = vld [vmem:[#allocation7 + $0xb0] sm:$0xf]
    %v174 = vld [vmem:[#allocation7 + $0xb4] sm:$0xf]
    %v175 = vld [vmem:[#allocation7 + $0xb8] sm:$0xf]
    %v176 = vld [vmem:[#allocation7 + $0xbc] sm:$0xf]
    %v225 = vunpack.c.l.b16 %v129
    %v226 = vunpack.c.l.b16 %v130
    %v227 = vunpack.c.l.b16 %v131
    %v228 = vunpack.c.l.b16 %v132
    %v229 = vunpack.c.l.b16 %v133
    %v230 = vunpack.c.l.b16 %v134
    %v231 = vunpack.c.l.b16 %v135
    %v232 = vunpack.c.l.b16 %v136
    %v233 = vunpack.c.l.b16 %v137
    %v234 = vunpack.c.l.b16 %v138
    %v235 = vunpack.c.l.b16 %v139
    %v236 = vunpack.c.l.b16 %v140
    %v237 = vunpack.c.l.b16 %v141
    %v238 = vunpack.c.l.b16 %v142
    %v239 = vunpack.c.l.b16 %v143
    %v240 = vunpack.c.l.b16 %v144
    %v241 = vunpack.c.l.b16 %v145
    %v242 = vunpack.c.l.b16 %v146
    %v243 = vunpack.c.l.b16 %v147
    %v244 = vunpack.c.l.b16 %v148
    %v245 = vunpack.c.l.b16 %v149
    %v246 = vunpack.c.l.b16 %v150
    %v247 = vunpack.c.l.b16 %v151
    %v248 = vunpack.c.l.b16 %v152
    %v249 = vunpack.c.l.b16 %v153
    %v250 = vunpack.c.l.b16 %v154
    %v251 = vunpack.c.l.b16 %v155
    %v252 = vunpack.c.l.b16 %v156
    %v253 = vunpack.c.l.b16 %v157
    %v254 = vunpack.c.l.b16 %v158
    %v255 = vunpack.c.l.b16 %v159
    %v256 = vunpack.c.l.b16 %v160
    %v257 = vunpack.c.l.b16 %v161
    %v258 = vunpack.c.l.b16 %v162
    %v259 = vunpack.c.l.b16 %v163
    %v260 = vunpack.c.l.b16 %v164
    %v261 = vunpack.c.l.b16 %v165
    %v262 = vunpack.c.l.b16 %v166
    %v263 = vunpack.c.l.b16 %v167
    %v264 = vunpack.c.l.b16 %v168
    %v265 = vunpack.c.l.b16 %v169
    %v266 = vunpack.c.l.b16 %v170
    %v267 = vunpack.c.l.b16 %v171
    %v268 = vunpack.c.l.b16 %v172
    %v269 = vunpack.c.l.b16 %v173
    %v270 = vunpack.c.l.b16 %v174
    %v271 = vunpack.c.l.b16 %v175
    %v272 = vunpack.c.l.b16 %v176
    %v273 = vpack.c.b16 %v226, %v225
    %v274 = vpack.c.b16 %v228, %v227
    %v275 = vpack.c.b16 %v230, %v229
    %v276 = vpack.c.b16 %v232, %v231
    %v277 = vpack.c.b16 %v234, %v233
    %v278 = vpack.c.b16 %v236, %v235
    %v279 = vpack.c.b16 %v238, %v237
    %v280 = vpack.c.b16 %v240, %v239
    %v281 = vpack.c.b16 %v242, %v241
    %v282 = vpack.c.b16 %v244, %v243
    %v283 = vpack.c.b16 %v246, %v245
    %v284 = vpack.c.b16 %v248, %v247
    %v285 = vpack.c.b16 %v250, %v249
    %v286 = vpack.c.b16 %v252, %v251
    %v287 = vpack.c.b16 %v254, %v253
    %v288 = vpack.c.b16 %v256, %v255
    %v289 = vpack.c.b16 %v258, %v257
    %v290 = vpack.c.b16 %v260, %v259
    %v291 = vpack.c.b16 %v262, %v261
    %v292 = vpack.c.b16 %v264, %v263
    %v293 = vpack.c.b16 %v266, %v265
    %v294 = vpack.c.b16 %v268, %v267
    %v295 = vpack.c.b16 %v270, %v269
    %v296 = vpack.c.b16 %v272, %v271
    %321 = vmatpush.bf16.msra.mxu0 %v280
    %322 = vmatpush.bf16.msra.mxu0 %v279
    %323 = vmatpush.bf16.msra.mxu0 %v278
    %324 = vmatpush.bf16.msra.mxu0 %v277
    %325 = vmatpush.bf16.msra.mxu0 %v276
    %326 = vmatpush.bf16.msra.mxu0 %v275
    %327 = vmatpush.bf16.msra.mxu0 %v274
    %328 = vmatpush.bf16.msra.mxu0 %v273
    %329 = vmatmul.bf16.gmra.mxu0 %v123
    %v330 = vpop.f32.mrf.mxu0
    %v331 = vadd.f32 0.0, %v330
    %v332 = vpop.f32.mrf.mxu0
    %v333 = vadd.f32 0.0, %v332
    %334 = vmatmul.bf16.gmra.mxu0 %v126
    %v335 = vpop.f32.mrf.mxu0
    %v336 = vadd.f32 0.0, %v335
    %v337 = vpop.f32.mrf.mxu0
    %v338 = vadd.f32 0.0, %v337
    %339 = vdwg.mxu0
    %340 = vmatpush.bf16.msra.mxu0 %v288
    %341 = vmatpush.bf16.msra.mxu0 %v287
    %342 = vmatpush.bf16.msra.mxu0 %v286
    %343 = vmatpush.bf16.msra.mxu0 %v285
    %344 = vmatpush.bf16.msra.mxu0 %v284
    %345 = vmatpush.bf16.msra.mxu0 %v283
    %346 = vmatpush.bf16.msra.mxu0 %v282
    %347 = vmatpush.bf16.msra.mxu0 %v281
    %348 = vmatmul.bf16.gmra.mxu0 %v124
    %v349 = vpop.f32.mrf.mxu0
    %v350 = vadd.f32 %v331, %v349
    %v351 = vpop.f32.mrf.mxu0
    %v352 = vadd.f32 %v333, %v351
    %353 = vmatmul.bf16.gmra.mxu0 %v127
    %v354 = vpop.f32.mrf.mxu0
    %v355 = vadd.f32 %v336, %v354
    %v356 = vpop.f32.mrf.mxu0
    %v357 = vadd.f32 %v338, %v356
    %358 = vdwg.mxu0
    %359 = vmatpush.bf16.msra.mxu0 %v296
    %360 = vmatpush.bf16.msra.mxu0 %v295
    %361 = vmatpush.bf16.msra.mxu0 %v294
    %362 = vmatpush.bf16.msra.mxu0 %v293
    %363 = vmatpush.bf16.msra.mxu0 %v292
    %364 = vmatpush.bf16.msra.mxu0 %v291
    %365 = vmatpush.bf16.msra.mxu0 %v290
    %366 = vmatpush.bf16.msra.mxu0 %v289
    %367 = vmatmul.bf16.gmra.mxu0 %v125
    %v368 = vpop.f32.mrf.mxu0
    %v369 = vadd.f32 %v350, %v368
    %v370 = vpop.f32.mrf.mxu0
    %v371 = vadd.f32 %v352, %v370
    %372 = vmatmul.bf16.gmra.mxu0 %v128
    %v373 = vpop.f32.mrf.mxu0
    %v374 = vadd.f32 %v355, %v373
    %v375 = vpop.f32.mrf.mxu0
    %v376 = vadd.f32 %v357, %v375
    %377 = vdwg.mxu0
    %v378 = vperm.slane %v89, 0
    %v379 = vmul.f32 %v369, %v378
    %v380 = vmul.f32 %v371, %v378
    %v381 = vmul.f32 %v374, %v378
    %v382 = vmul.f32 %v376, %v378
    %v383 = vperm.slane %v89, 1
    %v384 = vadd.f32 %v379, %v383
    %v385 = vadd.f32 %v380, %v383
    %v386 = vadd.f32 %v381, %v383
    %v387 = vadd.f32 %v382, %v383
    %v388 = vmax.f32 %v384, 0.0
    %v389 = vmax.f32 %v385, 0.0
    %v390 = vmax.f32 %v386, 0.0
    %v391 = vmax.f32 %v387, 0.0
    %v392 = vrot.slane %v388, 7
    %v393 = vrot.slane %v389, 7
    %v394 = vrot.slane %v390, 7
    %v395 = vrot.slane %v391, 7
    %v396 = vsel %vm101, %v394, %v395
    %v397 = vsel %vm101, %v393, %v394
    %v398 = vsel %vm101, %v392, %v393
    %v399 = vsel %vm101, %v395, %v392
    %v400 = vsel %vm93, %v399, 0.0
    %v401 = vsel %vm94, %v398, 0.0
    %v402 = vsel %vm93, %v397, 0.0
    %v403 = vsel %vm94, %v396, 0.0
    %v404 = vrot.slane %v388, 1
    %v405 = vrot.slane %v389, 1
    %v406 = vrot.slane %v390, 1
    %v407 = vrot.slane %v391, 1
    %v408 = vsel %vm114, %v406, %v407
    %v409 = vsel %vm114, %v405, %v406
    %v410 = vsel %vm114, %v404, %v405
    %v411 = vsel %vm114, %v407, %v404
    %v412 = vsel %vm95, %v410, 0.0
    %v413 = vsel %vm96, %v409, 0.0
    %v414 = vsel %vm95, %v408, 0.0
    %v415 = vsel %vm96, %v411, 0.0
    %v416 = vpack.c.bf16 %v401, %v400
    %v417 = vpack.c.bf16 %v389, %v388
    %v418 = vpack.c.bf16 %v413, %v412
    %v419 = vpack.c.bf16 %v403, %v402
    %v420 = vpack.c.bf16 %v391, %v390
    %v421 = vpack.c.bf16 %v415, %v414
    %v422 = vld [vmem:[#allocation9] sm:$0xf]
    %v423 = vld [vmem:[#allocation9 + $0x4] sm:$0xf]
    %v424 = vld [vmem:[#allocation9 + $0x8] sm:$0xf]
    %v425 = vld [vmem:[#allocation9 + $0xc] sm:$0xf]
    %v426 = vld [vmem:[#allocation9 + $0x10] sm:$0xf]
    %v427 = vld [vmem:[#allocation9 + $0x14] sm:$0xf]
    %v428 = vld [vmem:[#allocation9 + $0x18] sm:$0xf]
    %v429 = vld [vmem:[#allocation9 + $0x1c] sm:$0xf]
    %v430 = vld [vmem:[#allocation9 + $0x20] sm:$0xf]
    %v431 = vld [vmem:[#allocation9 + $0x24] sm:$0xf]
    %v432 = vld [vmem:[#allocation9 + $0x28] sm:$0xf]
    %v433 = vld [vmem:[#allocation9 + $0x2c] sm:$0xf]
    %v434 = vld [vmem:[#allocation9 + $0x30] sm:$0xf]
    %v435 = vld [vmem:[#allocation9 + $0x34] sm:$0xf]
    %v436 = vld [vmem:[#allocation9 + $0x38] sm:$0xf]
    %v437 = vld [vmem:[#allocation9 + $0x3c] sm:$0xf]
    %v438 = vld [vmem:[#allocation9 + $0x40] sm:$0xf]
    %v439 = vld [vmem:[#allocation9 + $0x44] sm:$0xf]
    %v440 = vld [vmem:[#allocation9 + $0x48] sm:$0xf]
    %v441 = vld [vmem:[#allocation9 + $0x4c] sm:$0xf]
    %v442 = vld [vmem:[#allocation9 + $0x50] sm:$0xf]
    %v443 = vld [vmem:[#allocation9 + $0x54] sm:$0xf]
    %v444 = vld [vmem:[#allocation9 + $0x58] sm:$0xf]
    %v445 = vld [vmem:[#allocation9 + $0x5c] sm:$0xf]
    %v446 = vld [vmem:[#allocation9 + $0x60] sm:$0xf]
    %v447 = vld [vmem:[#allocation9 + $0x64] sm:$0xf]
    %v448 = vld [vmem:[#allocation9 + $0x68] sm:$0xf]
    %v449 = vld [vmem:[#allocation9 + $0x6c] sm:$0xf]
    %v450 = vld [vmem:[#allocation9 + $0x70] sm:$0xf]
    %v451 = vld [vmem:[#allocation9 + $0x74] sm:$0xf]
    %v452 = vld [vmem:[#allocation9 + $0x78] sm:$0xf]
    %v453 = vld [vmem:[#allocation9 + $0x7c] sm:$0xf]
    %v454 = vld [vmem:[#allocation9 + $0x80] sm:$0xf]
    %v455 = vld [vmem:[#allocation9 + $0x84] sm:$0xf]
    %v456 = vld [vmem:[#allocation9 + $0x88] sm:$0xf]
    %v457 = vld [vmem:[#allocation9 + $0x8c] sm:$0xf]
    %v458 = vld [vmem:[#allocation9 + $0x90] sm:$0xf]
    %v459 = vld [vmem:[#allocation9 + $0x94] sm:$0xf]
    %v460 = vld [vmem:[#allocation9 + $0x98] sm:$0xf]
    %v461 = vld [vmem:[#allocation9 + $0x9c] sm:$0xf]
    %v462 = vld [vmem:[#allocation9 + $0xa0] sm:$0xf]
    %v463 = vld [vmem:[#allocation9 + $0xa4] sm:$0xf]
    %v464 = vld [vmem:[#allocation9 + $0xa8] sm:$0xf]
    %v465 = vld [vmem:[#allocation9 + $0xac] sm:$0xf]
    %v466 = vld [vmem:[#allocation9 + $0xb0] sm:$0xf]
    %v467 = vld [vmem:[#allocation9 + $0xb4] sm:$0xf]
    %v468 = vld [vmem:[#allocation9 + $0xb8] sm:$0xf]
    %v469 = vld [vmem:[#allocation9 + $0xbc] sm:$0xf]
    %v518 = vunpack.c.l.b16 %v422
    %v519 = vunpack.c.l.b16 %v423
    %v520 = vunpack.c.l.b16 %v424
    %v521 = vunpack.c.l.b16 %v425
    %v522 = vunpack.c.l.b16 %v426
    %v523 = vunpack.c.l.b16 %v427
    %v524 = vunpack.c.l.b16 %v428
    %v525 = vunpack.c.l.b16 %v429
    %v526 = vunpack.c.l.b16 %v430
    %v527 = vunpack.c.l.b16 %v431
    %v528 = vunpack.c.l.b16 %v432
    %v529 = vunpack.c.l.b16 %v433
    %v530 = vunpack.c.l.b16 %v434
    %v531 = vunpack.c.l.b16 %v435
    %v532 = vunpack.c.l.b16 %v436
    %v533 = vunpack.c.l.b16 %v437
    %v534 = vunpack.c.l.b16 %v438
    %v535 = vunpack.c.l.b16 %v439
    %v536 = vunpack.c.l.b16 %v440
    %v537 = vunpack.c.l.b16 %v441
    %v538 = vunpack.c.l.b16 %v442
    %v539 = vunpack.c.l.b16 %v443
    %v540 = vunpack.c.l.b16 %v444
    %v541 = vunpack.c.l.b16 %v445
    %v542 = vunpack.c.l.b16 %v446
    %v543 = vunpack.c.l.b16 %v447
    %v544 = vunpack.c.l.b16 %v448
    %v545 = vunpack.c.l.b16 %v449
    %v546 = vunpack.c.l.b16 %v450
    %v547 = vunpack.c.l.b16 %v451
    %v548 = vunpack.c.l.b16 %v452
    %v549 = vunpack.c.l.b16 %v453
    %v550 = vunpack.c.l.b16 %v454
    %v551 = vunpack.c.l.b16 %v455
    %v552 = vunpack.c.l.b16 %v456
    %v553 = vunpack.c.l.b16 %v457
    %v554 = vunpack.c.l.b16 %v458
    %v555 = vunpack.c.l.b16 %v459
    %v556 = vunpack.c.l.b16 %v460
    %v557 = vunpack.c.l.b16 %v461
    %v558 = vunpack.c.l.b16 %v462
    %v559 = vunpack.c.l.b16 %v463
    %v560 = vunpack.c.l.b16 %v464
    %v561 = vunpack.c.l.b16 %v465
    %v562 = vunpack.c.l.b16 %v466
    %v563 = vunpack.c.l.b16 %v467
    %v564 = vunpack.c.l.b16 %v468
    %v565 = vunpack.c.l.b16 %v469
    %v566 = vpack.c.b16 %v519, %v518
    %v567 = vpack.c.b16 %v521, %v520
    %v568 = vpack.c.b16 %v523, %v522
    %v569 = vpack.c.b16 %v525, %v524
    %v570 = vpack.c.b16 %v527, %v526
    %v571 = vpack.c.b16 %v529, %v528
    %v572 = vpack.c.b16 %v531, %v530
    %v573 = vpack.c.b16 %v533, %v532
    %v574 = vpack.c.b16 %v535, %v534
    %v575 = vpack.c.b16 %v537, %v536
    %v576 = vpack.c.b16 %v539, %v538
    %v577 = vpack.c.b16 %v541, %v540
    %v578 = vpack.c.b16 %v543, %v542
    %v579 = vpack.c.b16 %v545, %v544
    %v580 = vpack.c.b16 %v547, %v546
    %v581 = vpack.c.b16 %v549, %v548
    %v582 = vpack.c.b16 %v551, %v550
    %v583 = vpack.c.b16 %v553, %v552
    %v584 = vpack.c.b16 %v555, %v554
    %v585 = vpack.c.b16 %v557, %v556
    %v586 = vpack.c.b16 %v559, %v558
    %v587 = vpack.c.b16 %v561, %v560
    %v588 = vpack.c.b16 %v563, %v562
    %v589 = vpack.c.b16 %v565, %v564
    %614 = vmatpush.bf16.msra.mxu0 %v573
    %615 = vmatpush.bf16.msra.mxu0 %v572
    %616 = vmatpush.bf16.msra.mxu0 %v571
    %617 = vmatpush.bf16.msra.mxu0 %v570
    %618 = vmatpush.bf16.msra.mxu0 %v569
    %619 = vmatpush.bf16.msra.mxu0 %v568
    %620 = vmatpush.bf16.msra.mxu0 %v567
    %621 = vmatpush.bf16.msra.mxu0 %v566
    %622 = vmatmul.bf16.gmra.mxu0 %v416
    %v623 = vpop.f32.mrf.mxu0
    %v624 = vadd.f32 0.0, %v623
    %v625 = vpop.f32.mrf.mxu0
    %v626 = vadd.f32 0.0, %v625
    %627 = vmatmul.bf16.gmra.mxu0 %v419
    %v628 = vpop.f32.mrf.mxu0
    %v629 = vadd.f32 0.0, %v628
    %v630 = vpop.f32.mrf.mxu0
    %v631 = vadd.f32 0.0, %v630
    %632 = vdwg.mxu0
    %633 = vmatpush.bf16.msra.mxu0 %v581
    %634 = vmatpush.bf16.msra.mxu0 %v580
    %635 = vmatpush.bf16.msra.mxu0 %v579
    %636 = vmatpush.bf16.msra.mxu0 %v578
    %637 = vmatpush.bf16.msra.mxu0 %v577
    %638 = vmatpush.bf16.msra.mxu0 %v576
    %639 = vmatpush.bf16.msra.mxu0 %v575
    %640 = vmatpush.bf16.msra.mxu0 %v574
    %641 = vmatmul.bf16.gmra.mxu0 %v417
    %v642 = vpop.f32.mrf.mxu0
    %v643 = vadd.f32 %v624, %v642
    %v644 = vpop.f32.mrf.mxu0
    %v645 = vadd.f32 %v626, %v644
    %646 = vmatmul.bf16.gmra.mxu0 %v420
    %v647 = vpop.f32.mrf.mxu0
    %v648 = vadd.f32 %v629, %v647
    %v649 = vpop.f32.mrf.mxu0
    %v650 = vadd.f32 %v631, %v649
    %651 = vdwg.mxu0
    %652 = vmatpush.bf16.msra.mxu0 %v589
    %653 = vmatpush.bf16.msra.mxu0 %v588
    %654 = vmatpush.bf16.msra.mxu0 %v587
    %655 = vmatpush.bf16.msra.mxu0 %v586
    %656 = vmatpush.bf16.msra.mxu0 %v585
    %657 = vmatpush.bf16.msra.mxu0 %v584
    %658 = vmatpush.bf16.msra.mxu0 %v583
    %659 = vmatpush.bf16.msra.mxu0 %v582
    %660 = vmatmul.bf16.gmra.mxu0 %v418
    %v661 = vpop.f32.mrf.mxu0
    %v662 = vadd.f32 %v643, %v661
    %v663 = vpop.f32.mrf.mxu0
    %v664 = vadd.f32 %v645, %v663
    %665 = vmatmul.bf16.gmra.mxu0 %v421
    %v666 = vpop.f32.mrf.mxu0
    %v667 = vadd.f32 %v648, %v666
    %v668 = vpop.f32.mrf.mxu0
    %v669 = vadd.f32 %v650, %v668
    %670 = vdwg.mxu0
    %v671 = vperm.slane %v89, 2
    %v672 = vmul.f32 %v662, %v671
    %v673 = vmul.f32 %v664, %v671
    %v674 = vmul.f32 %v667, %v671
    %v675 = vmul.f32 %v669, %v671
    %v676 = vperm.slane %v89, 3
    %v677 = vadd.f32 %v672, %v676
    %v678 = vadd.f32 %v673, %v676
    %v679 = vadd.f32 %v674, %v676
    %v680 = vadd.f32 %v675, %v676
    %v681 = vadd.f32 %v677, %v85
    %v682 = vadd.f32 %v678, %v86
    %v683 = vadd.f32 %v679, %v87
    %v684 = vadd.f32 %v680, %v88
    %v685 = vmax.f32 %v681, 0.0
    %v686 = vmax.f32 %v682, 0.0
    %v687 = vmax.f32 %v683, 0.0
    %v688 = vmax.f32 %v684, 0.0
    %689 = vst [vmem:[#allocation12] sm:$0xff] %v685
    %690 = vst [vmem:[#allocation12 + $0x8] sm:$0xff] %v686
    %691 = vst [vmem:[#allocation12 + $0x10] sm:$0xff] %v687
    %692 = vst [vmem:[#allocation12 + $0x18] sm:$0xff] %v688
    // Predicated region
    $region34: #{tpu_custom_call.1} parent=1 // pred_check
      _
    $region35: #{tpu_custom_call.1} parent=1 // pred_check_branch
      %694 = sbr.rel (0) target = $region37
    $region36: #{tpu_custom_call.1} parent=1 // pred_region
      %696 = vsyncadd [#allocation6], 0
      %s697 = sshll.u32 [#allocation12], 4
      %s698 = int_to_ptr.vmem [resolvable:$true] %s697
      %s699 = sshll.u32 %s5, 4
      %s700 = int_to_ptr.hbm [resolvable:$true] %s699
      %705 = dma.vmem_to_hbm [thread:$0]  %s698, 512, %s700, [#allocation6], 128, 128, 8
    $region37: #{tpu_custom_call.1} parent=1 // pred_fallthru
      _
    // Predicated region
    $region38: #{tpu_custom_call.1} parent=1 // pred_check
      _
    $region39: #{tpu_custom_call.1} parent=1 // pred_check_branch
      %707 = sbr.rel (0) target = $region41
    $region40: #{tpu_custom_call.1} parent=1 // pred_region
      %709 = dma.done [#allocation6], 512
    $region41: #{tpu_custom_call.1} parent=1 // pred_fallthru
      _
    %710 = vsyncpa [#allocation5], 1
    %711 = vsyncpa [#allocation8], 1
    %712 = vsyncpa [#allocation11], 1
    %713 = vsyncpa [#allocation6], 1

// kernel: tpu_custom_call.1
$region0: #{tpu_custom_call.1}
  #allocation0 [shape = 'u32[]', space=smem, size = 0x4, offset = 0x4, fixed_abs, tag = 'smem constant byte address 0x4 - core index']
  #allocation1 [shape = 'u32[72,128]{1,0:T(1,128)}', space=vmem, size = 0x9000, scoped, tag = 'internal scratch']
  #allocation2 [shape = 's32[1]{0}', space=sflag, size = 0x4, scoped, tag = 'scoped memory for tpu_custom_call.1']
  #allocation3 [shape = 's32[1]{0:T(128)S(6)}', space=smem, size = 0x200, scoped, tag = 'prefetched SMEM operand 0']
  %s0 = inlined_call_operand.<no memory space> [shape: s32[1], index: 0, kind: input, shape index: {}]
  %s1 = inlined_call_operand.hbm [shape: f32[32,128], index: 1, kind: input, shape index: {}]
  %s2 = inlined_call_operand.hbm [shape: bf16[384,128], index: 2, kind: input, shape index: {}]
  %s3 = inlined_call_operand.hbm [shape: bf16[384,128], index: 3, kind: input, shape index: {}]
  %s4 = inlined_call_operand.hbm [shape: f32[2,4,128], index: 4, kind: input, shape index: {}]
  %s5 = inlined_call_operand.hbm [shape: f32[32,128], index: 5, kind: output, shape index: {}]
  %s6 = sld [smem:[#allocation0]]
  $region42: #{tpu_custom_call.1} parent=0
    _
  %s8 = ssub.s32 1, %s6
  %s9 = scalar_select 0, %s8, %s6
  %10 = sst [smem:[#allocation3]] %s0
  $region1: #{tpu_custom_call.1} parent=0
    #allocation4 [shape = 'u8[16384]{0}', space=vmem, size = 0x4000, scoped, tag = 'input window, operand 1, single buffered']
    #allocation5 [shape = 's32[1]{0}', space=sflag, size = 0x4, scoped, tag = 'scoped memory for tpu_custom_call.1']
    #allocation6 [shape = 's32[1]{0}', space=sflag, size = 0x4, scoped, tag = 'scoped memory for tpu_custom_call.1']
    #allocation7 [shape = 'u8[98304]{0}', space=vmem, size = 0x18000, scoped, tag = 'input window, operand 2, single buffered']
    #allocation8 [shape = 's32[1]{0}', space=sflag, size = 0x4, scoped, tag = 'scoped memory for tpu_custom_call.1']
    #allocation9 [shape = 'u8[98304]{0}', space=vmem, size = 0x18000, scoped, tag = 'input window, operand 3, single buffered']
    #allocation10 [shape = 'u8[2048]{0}', space=vmem, size = 0x800, scoped, tag = 'input window, operand 4, single buffered']
    #allocation11 [shape = 's32[1]{0}', space=sflag, size = 0x4, scoped, tag = 'scoped memory for tpu_custom_call.1']
    #allocation12 [shape = 'u8[16384]{0}', space=vmem, size = 0x4000, scoped, tag = 'output window, operand 0, single buffered']
    %11 = vsyncpa [#allocation5], 0
    %12 = vsyncpa [#allocation8], 0
    %13 = vsyncpa [#allocation11], 0
    %14 = vsyncpa [#allocation6], 0
    // Predicated region
    $region2: #{tpu_custom_call.1} parent=1 // pred_check
      _
    $region3: #{tpu_custom_call.1} parent=1 // pred_check_branch
      %16 = sbr.rel (0) target = $region5
    $region4: #{tpu_custom_call.1} parent=1 // pred_region
      %18 = vsyncadd [#allocation5], 0
      %s19 = sshll.u32 %s1, 4
      %s20 = int_to_ptr.hbm [resolvable:$true] %s19
      %s21 = sshll.u32 [#allocation4], 4
      %s22 = int_to_ptr.vmem [resolvable:$true] %s21
      %27 = dma.hbm_to_vmem [thread:$0]  %s20, 512, %s22, [#allocation5], 128, 128, 8
    $region5: #{tpu_custom_call.1} parent=1 // pred_fallthru
      _
    // Predicated region
    $region6: #{tpu_custom_call.1} parent=1 // pred_check
      _
    $region7: #{tpu_custom_call.1} parent=1 // pred_check_branch
      %29 = sbr.rel (0) target = $region9
    $region8: #{tpu_custom_call.1} parent=1 // pred_region
      %31 = vsyncadd [#allocation8], 0
      %s32 = sshll.u32 %s2, 4
      %s33 = int_to_ptr.hbm [resolvable:$true] %s32
      %s34 = sshll.u32 [#allocation7], 4
      %s35 = int_to_ptr.vmem [resolvable:$true] %s34
      %40 = dma.hbm_to_vmem [thread:$0]  %s33, 3072, %s35, [#allocation8], 64, 64, 4
    $region9: #{tpu_custom_call.1} parent=1 // pred_fallthru
      _
    // Predicated region
    $region10: #{tpu_custom_call.1} parent=1 // pred_check
      _
    $region11: #{tpu_custom_call.1} parent=1 // pred_check_branch
      %42 = sbr.rel (0) target = $region13
    $region12: #{tpu_custom_call.1} parent=1 // pred_region
      %44 = vsyncadd [#allocation8], 0
      %s45 = sshll.u32 %s3, 4
      %s46 = int_to_ptr.hbm [resolvable:$true] %s45
      %s47 = sshll.u32 [#allocation9], 4
      %s48 = int_to_ptr.vmem [resolvable:$true] %s47
      %53 = dma.hbm_to_vmem [thread:$0]  %s46, 3072, %s48, [#allocation8], 64, 64, 4
    $region13: #{tpu_custom_call.1} parent=1 // pred_fallthru
      _
    // Predicated region
    $region14: #{tpu_custom_call.1} parent=1 // pred_check
      _
    $region15: #{tpu_custom_call.1} parent=1 // pred_check_branch
      %55 = sbr.rel (0) target = $region17
    $region16: #{tpu_custom_call.1} parent=1 // pred_region
      %s56 = sld [smem:[#allocation3]]
      %58 = vsyncadd [#allocation11], 0
      %s59 = smul.addr %s56, 4
      %s60 = scalar_lea.hbm %s4, %s59
      %s62 = sshll.u32 %s60, 4
      %s63 = int_to_ptr.hbm [resolvable:$true] %s62
      %s64 = sshll.u32 [#allocation10], 4
      %s65 = int_to_ptr.vmem [resolvable:$true] %s64
      %67 = dma.hbm_to_vmem [thread:$0]  %s63, 64, %s65, [#allocation11]
    $region17: #{tpu_custom_call.1} parent=1 // pred_fallthru
      _
    // Predicated region
    $region18: #{tpu_custom_call.1} parent=1 // pred_check
      _
    $region19: #{tpu_custom_call.1} parent=1 // pred_check_branch
      %69 = sbr.rel (0) target = $region21
    $region20: #{tpu_custom_call.1} parent=1 // pred_region
      %71 = dma.done [#allocation5], 512
    $region21: #{tpu_custom_call.1} parent=1 // pred_fallthru
      _
    // Predicated region
    $region22: #{tpu_custom_call.1} parent=1 // pred_check
      _
    $region23: #{tpu_custom_call.1} parent=1 // pred_check_branch
      %73 = sbr.rel (0) target = $region25
    $region24: #{tpu_custom_call.1} parent=1 // pred_region
      %75 = dma.done [#allocation8], 3072
    $region25: #{tpu_custom_call.1} parent=1 // pred_fallthru
      _
    // Predicated region
    $region26: #{tpu_custom_call.1} parent=1 // pred_check
      _
    $region27: #{tpu_custom_call.1} parent=1 // pred_check_branch
      %77 = sbr.rel (0) target = $region29
    $region28: #{tpu_custom_call.1} parent=1 // pred_region
      %79 = dma.done [#allocation8], 3072
    $region29: #{tpu_custom_call.1} parent=1 // pred_fallthru
      _
    // Predicated region
    $region30: #{tpu_custom_call.1} parent=1 // pred_check
      _
    $region31: #{tpu_custom_call.1} parent=1 // pred_check_branch
      %81 = sbr.rel (0) target = $region33
    $region32: #{tpu_custom_call.1} parent=1 // pred_region
      %83 = dma.done [#allocation11], 64
    $region33: #{tpu_custom_call.1} parent=1 // pred_fallthru
      _
    %s84 = sld [smem:[#allocation3]]
    %v85 = vld [vmem:[#allocation4] sm:$0xff]
    %v86 = vld [vmem:[#allocation4 + $0x8] sm:$0xff]
    %v87 = vld [vmem:[#allocation4 + $0x10] sm:$0xff]
    %v88 = vld [vmem:[#allocation4 + $0x18] sm:$0xff]
    %v89 = vld [vmem:[#allocation10] sm:$0xf]
    %v90 = vlaneseq
    %v91 = vshrl.u32 %v90, 7
    %v92 = vadd.s32 %v91, 8
    %vm93 = vcmp.ne.s32.totalorder %v91, 0
    %vm94 = vcmp.ne.s32.totalorder %v92, 0
    %vm95 = vcmp.ne.s32.totalorder %v91, 15
    %vm96 = vcmp.ne.s32.totalorder %v92, 15
    %v97 = vrot.slane %v85, 7
    %v98 = vrot.slane %v86, 7
    %v99 = vrot.slane %v87, 7
    %v100 = vrot.slane %v88, 7
    %vm101 = vcmp.lt.s32.totalorder %v91, 1
    %v102 = vsel %vm101, %v99, %v100
    %v103 = vsel %vm101, %v98, %v99
    %v104 = vsel %vm101, %v97, %v98
    %v105 = vsel %vm101, %v100, %v97
    %v106 = vsel %vm93, %v105, 0.0
    %v107 = vsel %vm94, %v104, 0.0
    %v108 = vsel %vm93, %v103, 0.0
    %v109 = vsel %vm94, %v102, 0.0
    %v110 = vrot.slane %v85, 1
    %v111 = vrot.slane %v86, 1
    %v112 = vrot.slane %v87, 1
    %v113 = vrot.slane %v88, 1
    %vm114 = vcmp.lt.s32.totalorder %v91, 7
    %v115 = vsel %vm114, %v112, %v113
    %v116 = vsel %vm114, %v111, %v112
    %v117 = vsel %vm114, %v110, %v111
    %v118 = vsel %vm114, %v113, %v110
    %v119 = vsel %vm95, %v117, 0.0
    %v120 = vsel %vm96, %v116, 0.0
    %v121 = vsel %vm95, %v115, 0.0
    %v122 = vsel %vm96, %v118, 0.0
    %v123 = vpack.c.bf16 %v107, %v106
    %v124 = vpack.c.bf16 %v86, %v85
    %v125 = vpack.c.bf16 %v120, %v119
    %v126 = vpack.c.bf16 %v109, %v108
    %v127 = vpack.c.bf16 %v88, %v87
    %v128 = vpack.c.bf16 %v122, %v121
    %v129 = vld [vmem:[#allocation7] sm:$0xf]
    %v130 = vld [vmem:[#allocation7 + $0x4] sm:$0xf]
    %v131 = vld [vmem:[#allocation7 + $0x8] sm:$0xf]
    %v132 = vld [vmem:[#allocation7 + $0xc] sm:$0xf]
    %v133 = vld [vmem:[#allocation7 + $0x10] sm:$0xf]
    %v134 = vld [vmem:[#allocation7 + $0x14] sm:$0xf]
    %v135 = vld [vmem:[#allocation7 + $0x18] sm:$0xf]
    %v136 = vld [vmem:[#allocation7 + $0x1c] sm:$0xf]
    %v137 = vld [vmem:[#allocation7 + $0x20] sm:$0xf]
    %v138 = vld [vmem:[#allocation7 + $0x24] sm:$0xf]
    %v139 = vld [vmem:[#allocation7 + $0x28] sm:$0xf]
    %v140 = vld [vmem:[#allocation7 + $0x2c] sm:$0xf]
    %v141 = vld [vmem:[#allocation7 + $0x30] sm:$0xf]
    %v142 = vld [vmem:[#allocation7 + $0x34] sm:$0xf]
    %v143 = vld [vmem:[#allocation7 + $0x38] sm:$0xf]
    %v144 = vld [vmem:[#allocation7 + $0x3c] sm:$0xf]
    %v145 = vld [vmem:[#allocation7 + $0x40] sm:$0xf]
    %v146 = vld [vmem:[#allocation7 + $0x44] sm:$0xf]
    %v147 = vld [vmem:[#allocation7 + $0x48] sm:$0xf]
    %v148 = vld [vmem:[#allocation7 + $0x4c] sm:$0xf]
    %v149 = vld [vmem:[#allocation7 + $0x50] sm:$0xf]
    %v150 = vld [vmem:[#allocation7 + $0x54] sm:$0xf]
    %v151 = vld [vmem:[#allocation7 + $0x58] sm:$0xf]
    %v152 = vld [vmem:[#allocation7 + $0x5c] sm:$0xf]
    %v153 = vld [vmem:[#allocation7 + $0x60] sm:$0xf]
    %v154 = vld [vmem:[#allocation7 + $0x64] sm:$0xf]
    %v155 = vld [vmem:[#allocation7 + $0x68] sm:$0xf]
    %v156 = vld [vmem:[#allocation7 + $0x6c] sm:$0xf]
    %v157 = vld [vmem:[#allocation7 + $0x70] sm:$0xf]
    %v158 = vld [vmem:[#allocation7 + $0x74] sm:$0xf]
    %v159 = vld [vmem:[#allocation7 + $0x78] sm:$0xf]
    %v160 = vld [vmem:[#allocation7 + $0x7c] sm:$0xf]
    %v161 = vld [vmem:[#allocation7 + $0x80] sm:$0xf]
    %v162 = vld [vmem:[#allocation7 + $0x84] sm:$0xf]
    %v163 = vld [vmem:[#allocation7 + $0x88] sm:$0xf]
    %v164 = vld [vmem:[#allocation7 + $0x8c] sm:$0xf]
    %v165 = vld [vmem:[#allocation7 + $0x90] sm:$0xf]
    %v166 = vld [vmem:[#allocation7 + $0x94] sm:$0xf]
    %v167 = vld [vmem:[#allocation7 + $0x98] sm:$0xf]
    %v168 = vld [vmem:[#allocation7 + $0x9c] sm:$0xf]
    %v169 = vld [vmem:[#allocation7 + $0xa0] sm:$0xf]
    %v170 = vld [vmem:[#allocation7 + $0xa4] sm:$0xf]
    %v171 = vld [vmem:[#allocation7 + $0xa8] sm:$0xf]
    %v172 = vld [vmem:[#allocation7 + $0xac] sm:$0xf]
    %v173 = vld [vmem:[#allocation7 + $0xb0] sm:$0xf]
    %v174 = vld [vmem:[#allocation7 + $0xb4] sm:$0xf]
    %v175 = vld [vmem:[#allocation7 + $0xb8] sm:$0xf]
    %v176 = vld [vmem:[#allocation7 + $0xbc] sm:$0xf]
    %v225 = vunpack.c.l.b16 %v129
    %v226 = vunpack.c.l.b16 %v130
    %v227 = vunpack.c.l.b16 %v131
    %v228 = vunpack.c.l.b16 %v132
    %v229 = vunpack.c.l.b16 %v133
    %v230 = vunpack.c.l.b16 %v134
    %v231 = vunpack.c.l.b16 %v135
    %v232 = vunpack.c.l.b16 %v136
    %v233 = vunpack.c.l.b16 %v137
    %v234 = vunpack.c.l.b16 %v138
    %v235 = vunpack.c.l.b16 %v139
    %v236 = vunpack.c.l.b16 %v140
    %v237 = vunpack.c.l.b16 %v141
    %v238 = vunpack.c.l.b16 %v142
    %v239 = vunpack.c.l.b16 %v143
    %v240 = vunpack.c.l.b16 %v144
    %v241 = vunpack.c.l.b16 %v145
    %v242 = vunpack.c.l.b16 %v146
    %v243 = vunpack.c.l.b16 %v147
    %v244 = vunpack.c.l.b16 %v148
    %v245 = vunpack.c.l.b16 %v149
    %v246 = vunpack.c.l.b16 %v150
    %v247 = vunpack.c.l.b16 %v151
    %v248 = vunpack.c.l.b16 %v152
    %v249 = vunpack.c.l.b16 %v153
    %v250 = vunpack.c.l.b16 %v154
    %v251 = vunpack.c.l.b16 %v155
    %v252 = vunpack.c.l.b16 %v156
    %v253 = vunpack.c.l.b16 %v157
    %v254 = vunpack.c.l.b16 %v158
    %v255 = vunpack.c.l.b16 %v159
    %v256 = vunpack.c.l.b16 %v160
    %v257 = vunpack.c.l.b16 %v161
    %v258 = vunpack.c.l.b16 %v162
    %v259 = vunpack.c.l.b16 %v163
    %v260 = vunpack.c.l.b16 %v164
    %v261 = vunpack.c.l.b16 %v165
    %v262 = vunpack.c.l.b16 %v166
    %v263 = vunpack.c.l.b16 %v167
    %v264 = vunpack.c.l.b16 %v168
    %v265 = vunpack.c.l.b16 %v169
    %v266 = vunpack.c.l.b16 %v170
    %v267 = vunpack.c.l.b16 %v171
    %v268 = vunpack.c.l.b16 %v172
    %v269 = vunpack.c.l.b16 %v173
    %v270 = vunpack.c.l.b16 %v174
    %v271 = vunpack.c.l.b16 %v175
    %v272 = vunpack.c.l.b16 %v176
    %v273 = vpack.c.b16 %v226, %v225
    %v274 = vpack.c.b16 %v228, %v227
    %v275 = vpack.c.b16 %v230, %v229
    %v276 = vpack.c.b16 %v232, %v231
    %v277 = vpack.c.b16 %v234, %v233
    %v278 = vpack.c.b16 %v236, %v235
    %v279 = vpack.c.b16 %v238, %v237
    %v280 = vpack.c.b16 %v240, %v239
    %v281 = vpack.c.b16 %v242, %v241
    %v282 = vpack.c.b16 %v244, %v243
    %v283 = vpack.c.b16 %v246, %v245
    %v284 = vpack.c.b16 %v248, %v247
    %v285 = vpack.c.b16 %v250, %v249
    %v286 = vpack.c.b16 %v252, %v251
    %v287 = vpack.c.b16 %v254, %v253
    %v288 = vpack.c.b16 %v256, %v255
    %v289 = vpack.c.b16 %v258, %v257
    %v290 = vpack.c.b16 %v260, %v259
    %v291 = vpack.c.b16 %v262, %v261
    %v292 = vpack.c.b16 %v264, %v263
    %v293 = vpack.c.b16 %v266, %v265
    %v294 = vpack.c.b16 %v268, %v267
    %v295 = vpack.c.b16 %v270, %v269
    %v296 = vpack.c.b16 %v272, %v271
    %321 = vmatpush.bf16.msra.mxu0 %v280
    %322 = vmatpush.bf16.msra.mxu0 %v279
    %323 = vmatpush.bf16.msra.mxu0 %v278
    %324 = vmatpush.bf16.msra.mxu0 %v277
    %325 = vmatpush.bf16.msra.mxu0 %v276
    %326 = vmatpush.bf16.msra.mxu0 %v275
    %327 = vmatpush.bf16.msra.mxu0 %v274
    %328 = vmatpush.bf16.msra.mxu0 %v273
    %329 = vmatmul.bf16.gmra.mxu0 %v123
    %v330 = vpop.f32.mrf.mxu0
    %v331 = vadd.f32 0.0, %v330
    %v332 = vpop.f32.mrf.mxu0
    %v333 = vadd.f32 0.0, %v332
    %334 = vmatmul.bf16.gmra.mxu0 %v126
    %v335 = vpop.f32.mrf.mxu0
    %v336 = vadd.f32 0.0, %v335
    %v337 = vpop.f32.mrf.mxu0
    %v338 = vadd.f32 0.0, %v337
    %339 = vdwg.mxu0
    %340 = vmatpush.bf16.msra.mxu0 %v288
    %341 = vmatpush.bf16.msra.mxu0 %v287
    %342 = vmatpush.bf16.msra.mxu0 %v286
    %343 = vmatpush.bf16.msra.mxu0 %v285
    %344 = vmatpush.bf16.msra.mxu0 %v284
    %345 = vmatpush.bf16.msra.mxu0 %v283
    %346 = vmatpush.bf16.msra.mxu0 %v282
    %347 = vmatpush.bf16.msra.mxu0 %v281
    %348 = vmatmul.bf16.gmra.mxu0 %v124
    %v349 = vpop.f32.mrf.mxu0
    %v350 = vadd.f32 %v331, %v349
    %v351 = vpop.f32.mrf.mxu0
    %v352 = vadd.f32 %v333, %v351
    %353 = vmatmul.bf16.gmra.mxu0 %v127
    %v354 = vpop.f32.mrf.mxu0
    %v355 = vadd.f32 %v336, %v354
    %v356 = vpop.f32.mrf.mxu0
    %v357 = vadd.f32 %v338, %v356
    %358 = vdwg.mxu0
    %359 = vmatpush.bf16.msra.mxu0 %v296
    %360 = vmatpush.bf16.msra.mxu0 %v295
    %361 = vmatpush.bf16.msra.mxu0 %v294
    %362 = vmatpush.bf16.msra.mxu0 %v293
    %363 = vmatpush.bf16.msra.mxu0 %v292
    %364 = vmatpush.bf16.msra.mxu0 %v291
    %365 = vmatpush.bf16.msra.mxu0 %v290
    %366 = vmatpush.bf16.msra.mxu0 %v289
    %367 = vmatmul.bf16.gmra.mxu0 %v125
    %v368 = vpop.f32.mrf.mxu0
    %v369 = vadd.f32 %v350, %v368
    %v370 = vpop.f32.mrf.mxu0
    %v371 = vadd.f32 %v352, %v370
    %372 = vmatmul.bf16.gmra.mxu0 %v128
    %v373 = vpop.f32.mrf.mxu0
    %v374 = vadd.f32 %v355, %v373
    %v375 = vpop.f32.mrf.mxu0
    %v376 = vadd.f32 %v357, %v375
    %377 = vdwg.mxu0
    %v378 = vperm.slane %v89, 0
    %v379 = vmul.f32 %v369, %v378
    %v380 = vmul.f32 %v371, %v378
    %v381 = vmul.f32 %v374, %v378
    %v382 = vmul.f32 %v376, %v378
    %v383 = vperm.slane %v89, 1
    %v384 = vadd.f32 %v379, %v383
    %v385 = vadd.f32 %v380, %v383
    %v386 = vadd.f32 %v381, %v383
    %v387 = vadd.f32 %v382, %v383
    %v388 = vmax.f32 %v384, 0.0
    %v389 = vmax.f32 %v385, 0.0
    %v390 = vmax.f32 %v386, 0.0
    %v391 = vmax.f32 %v387, 0.0
    %v392 = vrot.slane %v388, 7
    %v393 = vrot.slane %v389, 7
    %v394 = vrot.slane %v390, 7
    %v395 = vrot.slane %v391, 7
    %v396 = vsel %vm101, %v394, %v395
    %v397 = vsel %vm101, %v393, %v394
    %v398 = vsel %vm101, %v392, %v393
    %v399 = vsel %vm101, %v395, %v392
    %v400 = vsel %vm93, %v399, 0.0
    %v401 = vsel %vm94, %v398, 0.0
    %v402 = vsel %vm93, %v397, 0.0
    %v403 = vsel %vm94, %v396, 0.0
    %v404 = vrot.slane %v388, 1
    %v405 = vrot.slane %v389, 1
    %v406 = vrot.slane %v390, 1
    %v407 = vrot.slane %v391, 1
    %v408 = vsel %vm114, %v406, %v407
    %v409 = vsel %vm114, %v405, %v406
    %v410 = vsel %vm114, %v404, %v405
    %v411 = vsel %vm114, %v407, %v404
    %v412 = vsel %vm95, %v410, 0.0
    %v413 = vsel %vm96, %v409, 0.0
    %v414 = vsel %vm95, %v408, 0.0
    %v415 = vsel %vm96, %v411, 0.0
    %v416 = vpack.c.bf16 %v401, %v400
    %v417 = vpack.c.bf16 %v389, %v388
    %v418 = vpack.c.bf16 %v413, %v412
    %v419 = vpack.c.bf16 %v403, %v402
    %v420 = vpack.c.bf16 %v391, %v390
    %v421 = vpack.c.bf16 %v415, %v414
    %v422 = vld [vmem:[#allocation9] sm:$0xf]
    %v423 = vld [vmem:[#allocation9 + $0x4] sm:$0xf]
    %v424 = vld [vmem:[#allocation9 + $0x8] sm:$0xf]
    %v425 = vld [vmem:[#allocation9 + $0xc] sm:$0xf]
    %v426 = vld [vmem:[#allocation9 + $0x10] sm:$0xf]
    %v427 = vld [vmem:[#allocation9 + $0x14] sm:$0xf]
    %v428 = vld [vmem:[#allocation9 + $0x18] sm:$0xf]
    %v429 = vld [vmem:[#allocation9 + $0x1c] sm:$0xf]
    %v430 = vld [vmem:[#allocation9 + $0x20] sm:$0xf]
    %v431 = vld [vmem:[#allocation9 + $0x24] sm:$0xf]
    %v432 = vld [vmem:[#allocation9 + $0x28] sm:$0xf]
    %v433 = vld [vmem:[#allocation9 + $0x2c] sm:$0xf]
    %v434 = vld [vmem:[#allocation9 + $0x30] sm:$0xf]
    %v435 = vld [vmem:[#allocation9 + $0x34] sm:$0xf]
    %v436 = vld [vmem:[#allocation9 + $0x38] sm:$0xf]
    %v437 = vld [vmem:[#allocation9 + $0x3c] sm:$0xf]
    %v438 = vld [vmem:[#allocation9 + $0x40] sm:$0xf]
    %v439 = vld [vmem:[#allocation9 + $0x44] sm:$0xf]
    %v440 = vld [vmem:[#allocation9 + $0x48] sm:$0xf]
    %v441 = vld [vmem:[#allocation9 + $0x4c] sm:$0xf]
    %v442 = vld [vmem:[#allocation9 + $0x50] sm:$0xf]
    %v443 = vld [vmem:[#allocation9 + $0x54] sm:$0xf]
    %v444 = vld [vmem:[#allocation9 + $0x58] sm:$0xf]
    %v445 = vld [vmem:[#allocation9 + $0x5c] sm:$0xf]
    %v446 = vld [vmem:[#allocation9 + $0x60] sm:$0xf]
    %v447 = vld [vmem:[#allocation9 + $0x64] sm:$0xf]
    %v448 = vld [vmem:[#allocation9 + $0x68] sm:$0xf]
    %v449 = vld [vmem:[#allocation9 + $0x6c] sm:$0xf]
    %v450 = vld [vmem:[#allocation9 + $0x70] sm:$0xf]
    %v451 = vld [vmem:[#allocation9 + $0x74] sm:$0xf]
    %v452 = vld [vmem:[#allocation9 + $0x78] sm:$0xf]
    %v453 = vld [vmem:[#allocation9 + $0x7c] sm:$0xf]
    %v454 = vld [vmem:[#allocation9 + $0x80] sm:$0xf]
    %v455 = vld [vmem:[#allocation9 + $0x84] sm:$0xf]
    %v456 = vld [vmem:[#allocation9 + $0x88] sm:$0xf]
    %v457 = vld [vmem:[#allocation9 + $0x8c] sm:$0xf]
    %v458 = vld [vmem:[#allocation9 + $0x90] sm:$0xf]
    %v459 = vld [vmem:[#allocation9 + $0x94] sm:$0xf]
    %v460 = vld [vmem:[#allocation9 + $0x98] sm:$0xf]
    %v461 = vld [vmem:[#allocation9 + $0x9c] sm:$0xf]
    %v462 = vld [vmem:[#allocation9 + $0xa0] sm:$0xf]
    %v463 = vld [vmem:[#allocation9 + $0xa4] sm:$0xf]
    %v464 = vld [vmem:[#allocation9 + $0xa8] sm:$0xf]
    %v465 = vld [vmem:[#allocation9 + $0xac] sm:$0xf]
    %v466 = vld [vmem:[#allocation9 + $0xb0] sm:$0xf]
    %v467 = vld [vmem:[#allocation9 + $0xb4] sm:$0xf]
    %v468 = vld [vmem:[#allocation9 + $0xb8] sm:$0xf]
    %v469 = vld [vmem:[#allocation9 + $0xbc] sm:$0xf]
    %v518 = vunpack.c.l.b16 %v422
    %v519 = vunpack.c.l.b16 %v423
    %v520 = vunpack.c.l.b16 %v424
    %v521 = vunpack.c.l.b16 %v425
    %v522 = vunpack.c.l.b16 %v426
    %v523 = vunpack.c.l.b16 %v427
    %v524 = vunpack.c.l.b16 %v428
    %v525 = vunpack.c.l.b16 %v429
    %v526 = vunpack.c.l.b16 %v430
    %v527 = vunpack.c.l.b16 %v431
    %v528 = vunpack.c.l.b16 %v432
    %v529 = vunpack.c.l.b16 %v433
    %v530 = vunpack.c.l.b16 %v434
    %v531 = vunpack.c.l.b16 %v435
    %v532 = vunpack.c.l.b16 %v436
    %v533 = vunpack.c.l.b16 %v437
    %v534 = vunpack.c.l.b16 %v438
    %v535 = vunpack.c.l.b16 %v439
    %v536 = vunpack.c.l.b16 %v440
    %v537 = vunpack.c.l.b16 %v441
    %v538 = vunpack.c.l.b16 %v442
    %v539 = vunpack.c.l.b16 %v443
    %v540 = vunpack.c.l.b16 %v444
    %v541 = vunpack.c.l.b16 %v445
    %v542 = vunpack.c.l.b16 %v446
    %v543 = vunpack.c.l.b16 %v447
    %v544 = vunpack.c.l.b16 %v448
    %v545 = vunpack.c.l.b16 %v449
    %v546 = vunpack.c.l.b16 %v450
    %v547 = vunpack.c.l.b16 %v451
    %v548 = vunpack.c.l.b16 %v452
    %v549 = vunpack.c.l.b16 %v453
    %v550 = vunpack.c.l.b16 %v454
    %v551 = vunpack.c.l.b16 %v455
    %v552 = vunpack.c.l.b16 %v456
    %v553 = vunpack.c.l.b16 %v457
    %v554 = vunpack.c.l.b16 %v458
    %v555 = vunpack.c.l.b16 %v459
    %v556 = vunpack.c.l.b16 %v460
    %v557 = vunpack.c.l.b16 %v461
    %v558 = vunpack.c.l.b16 %v462
    %v559 = vunpack.c.l.b16 %v463
    %v560 = vunpack.c.l.b16 %v464
    %v561 = vunpack.c.l.b16 %v465
    %v562 = vunpack.c.l.b16 %v466
    %v563 = vunpack.c.l.b16 %v467
    %v564 = vunpack.c.l.b16 %v468
    %v565 = vunpack.c.l.b16 %v469
    %v566 = vpack.c.b16 %v519, %v518
    %v567 = vpack.c.b16 %v521, %v520
    %v568 = vpack.c.b16 %v523, %v522
    %v569 = vpack.c.b16 %v525, %v524
    %v570 = vpack.c.b16 %v527, %v526
    %v571 = vpack.c.b16 %v529, %v528
    %v572 = vpack.c.b16 %v531, %v530
    %v573 = vpack.c.b16 %v533, %v532
    %v574 = vpack.c.b16 %v535, %v534
    %v575 = vpack.c.b16 %v537, %v536
    %v576 = vpack.c.b16 %v539, %v538
    %v577 = vpack.c.b16 %v541, %v540
    %v578 = vpack.c.b16 %v543, %v542
    %v579 = vpack.c.b16 %v545, %v544
    %v580 = vpack.c.b16 %v547, %v546
    %v581 = vpack.c.b16 %v549, %v548
    %v582 = vpack.c.b16 %v551, %v550
    %v583 = vpack.c.b16 %v553, %v552
    %v584 = vpack.c.b16 %v555, %v554
    %v585 = vpack.c.b16 %v557, %v556
    %v586 = vpack.c.b16 %v559, %v558
    %v587 = vpack.c.b16 %v561, %v560
    %v588 = vpack.c.b16 %v563, %v562
    %v589 = vpack.c.b16 %v565, %v564
    %614 = vmatpush.bf16.msra.mxu0 %v573
    %615 = vmatpush.bf16.msra.mxu0 %v572
    %616 = vmatpush.bf16.msra.mxu0 %v571
    %617 = vmatpush.bf16.msra.mxu0 %v570
    %618 = vmatpush.bf16.msra.mxu0 %v569
    %619 = vmatpush.bf16.msra.mxu0 %v568
    %620 = vmatpush.bf16.msra.mxu0 %v567
    %621 = vmatpush.bf16.msra.mxu0 %v566
    %622 = vmatmul.bf16.gmra.mxu0 %v416
    %v623 = vpop.f32.mrf.mxu0
    %v624 = vadd.f32 0.0, %v623
    %v625 = vpop.f32.mrf.mxu0
    %v626 = vadd.f32 0.0, %v625
    %627 = vmatmul.bf16.gmra.mxu0 %v419
    %v628 = vpop.f32.mrf.mxu0
    %v629 = vadd.f32 0.0, %v628
    %v630 = vpop.f32.mrf.mxu0
    %v631 = vadd.f32 0.0, %v630
    %632 = vdwg.mxu0
    %633 = vmatpush.bf16.msra.mxu0 %v581
    %634 = vmatpush.bf16.msra.mxu0 %v580
    %635 = vmatpush.bf16.msra.mxu0 %v579
    %636 = vmatpush.bf16.msra.mxu0 %v578
    %637 = vmatpush.bf16.msra.mxu0 %v577
    %638 = vmatpush.bf16.msra.mxu0 %v576
    %639 = vmatpush.bf16.msra.mxu0 %v575
    %640 = vmatpush.bf16.msra.mxu0 %v574
    %641 = vmatmul.bf16.gmra.mxu0 %v417
    %v642 = vpop.f32.mrf.mxu0
    %v643 = vadd.f32 %v624, %v642
    %v644 = vpop.f32.mrf.mxu0
    %v645 = vadd.f32 %v626, %v644
    %646 = vmatmul.bf16.gmra.mxu0 %v420
    %v647 = vpop.f32.mrf.mxu0
    %v648 = vadd.f32 %v629, %v647
    %v649 = vpop.f32.mrf.mxu0
    %v650 = vadd.f32 %v631, %v649
    %651 = vdwg.mxu0
    %652 = vmatpush.bf16.msra.mxu0 %v589
    %653 = vmatpush.bf16.msra.mxu0 %v588
    %654 = vmatpush.bf16.msra.mxu0 %v587
    %655 = vmatpush.bf16.msra.mxu0 %v586
    %656 = vmatpush.bf16.msra.mxu0 %v585
    %657 = vmatpush.bf16.msra.mxu0 %v584
    %658 = vmatpush.bf16.msra.mxu0 %v583
    %659 = vmatpush.bf16.msra.mxu0 %v582
    %660 = vmatmul.bf16.gmra.mxu0 %v418
    %v661 = vpop.f32.mrf.mxu0
    %v662 = vadd.f32 %v643, %v661
    %v663 = vpop.f32.mrf.mxu0
    %v664 = vadd.f32 %v645, %v663
    %665 = vmatmul.bf16.gmra.mxu0 %v421
    %v666 = vpop.f32.mrf.mxu0
    %v667 = vadd.f32 %v648, %v666
    %v668 = vpop.f32.mrf.mxu0
    %v669 = vadd.f32 %v650, %v668
    %670 = vdwg.mxu0
    %v671 = vperm.slane %v89, 2
    %v672 = vmul.f32 %v662, %v671
    %v673 = vmul.f32 %v664, %v671
    %v674 = vmul.f32 %v667, %v671
    %v675 = vmul.f32 %v669, %v671
    %v676 = vperm.slane %v89, 3
    %v677 = vadd.f32 %v672, %v676
    %v678 = vadd.f32 %v673, %v676
    %v679 = vadd.f32 %v674, %v676
    %v680 = vadd.f32 %v675, %v676
    %v681 = vadd.f32 %v677, %v85
    %v682 = vadd.f32 %v678, %v86
    %v683 = vadd.f32 %v679, %v87
    %v684 = vadd.f32 %v680, %v88
    %v685 = vmax.f32 %v681, 0.0
    %v686 = vmax.f32 %v682, 0.0
    %v687 = vmax.f32 %v683, 0.0
    %v688 = vmax.f32 %v684, 0.0
    %689 = vst [vmem:[#allocation12] sm:$0xff] %v685
    %690 = vst [vmem:[#allocation12 + $0x8] sm:$0xff] %v686
    %691 = vst [vmem:[#allocation12 + $0x10] sm:$0xff] %v687
    %692 = vst [vmem:[#allocation12 + $0x18] sm:$0xff] %v688
    // Predicated region
    $region34: #{tpu_custom_call.1} parent=1 // pred_check
      _
    $region35: #{tpu_custom_call.1} parent=1 // pred_check_branch
      %694 = sbr.rel (0) target = $region37
    $region36: #{tpu_custom_call.1} parent=1 // pred_region
      %696 = vsyncadd [#allocation6], 0
      %s697 = sshll.u32 [#allocation12], 4
      %s698 = int_to_ptr.vmem [resolvable:$true] %s697
      %s699 = sshll.u32 %s5, 4
      %s700 = int_to_ptr.hbm [resolvable:$true] %s699
      %705 = dma.vmem_to_hbm [thread:$0]  %s698, 512, %s700, [#allocation6], 128, 128, 8
    $region37: #{tpu_custom_call.1} parent=1 // pred_fallthru
      _
    // Predicated region
    $region38: #{tpu_custom_call.1} parent=1 // pred_check
      _
    $region39: #{tpu_custom_call.1} parent=1 // pred_check_branch
      %707 = sbr.rel (0) target = $region41
    $region40: #{tpu_custom_call.1} parent=1 // pred_region
      %709 = dma.done [#allocation6], 512
    $region41: #{tpu_custom_call.1} parent=1 // pred_fallthru
      _
    %710 = vsyncpa [#allocation5], 1
    %711 = vsyncpa [#allocation8], 1
    %712 = vsyncpa [#allocation11], 1
    %713 = vsyncpa [#allocation6], 1

</llo_original>
